<compile_context>
chip_gen: v6e
topology: v6e:2x2x1
jax: 0.10.0
libtpu: 0.0.40
codegen_flags: <defaults>
</compile_context>

<pallas_src>
import functools
import math

import jax
import jax.numpy as jnp
from jax import lax
from jax.experimental import pallas as pl
from jax.experimental.pallas import tpu as pltpu


def _rnn_bidir_cat_kernel(
    emb_ref,      # (T, Bt, F)    f32  time-major embedded input (batch zero-padded)
    len_ref,      # (Bt, 1)       int32 valid lengths (0 for batch-pad rows)
    w_ih_ref,     # (F, 2Up)      bf16 [W_ih_fwd | W_ih_bwd]  (pad lanes zero)
    b_ref,        # (1, 2Up)      f32  [b_fwd | b_bwd]  (b_ih + b_hh folded)
    w_hh_ref,     # (2Up, 2Up)    bf16 block-diag [[W_hh_f, 0], [0, W_hh_b]]
    w_lin_ref,    # (4Up, Cp)     bf16 final linear, rows grouped per pooled chunk
    b_lin_ref,    # (1, Cp)       f32
    out_ref,      # (Bt, Cp)      f32 logits
    xp_ref,       # scratch (T, Bt, 2Up) bf16: precomputed input projections
    *, fuse_dirs: bool, unroll,
):
    T, Bt, F = emb_ref.shape
    two_up = w_hh_ref.shape[0]
    Up = two_up // 2

    # ---- Hoisted input projection: both directions, all timesteps, one matmul.
    emb2d = emb_ref[...].reshape(T * Bt, F).astype(jnp.bfloat16)
    xp = (jnp.dot(emb2d, w_ih_ref[...], preferred_element_type=jnp.float32)
          + b_ref[...])                                   # (T*Bt, 2Up) f32
    xp_ref[...] = xp.reshape(T, Bt, two_up).astype(jnp.bfloat16)

    # ---- Hoisted masking constants (no per-step lengths broadcast).
    lane = lax.broadcasted_iota(jnp.int32, (1, two_up), 1)
    is_bwd = (lane >= Up).astype(jnp.int32)               # 0 on fwd lanes, 1 on bwd
    base = is_bwd * (T - 1)                               # fwd: 0      bwd: T-1
    sign = 1 - 2 * is_bwd                                 # fwd: +1     bwd: -1
    len_b = jnp.broadcast_to(len_ref[...], (Bt, two_up))  # hoisted broadcast

    def step_mask(i):
        # fwd half: lengths > i ; bwd half: lengths > T-1-i  (packed-seq validity)
        return len_b > (base + i * sign)

    if fuse_dirs:
        w_hh = w_hh_ref[...]                              # (2Up, 2Up) bf16
    else:
        w_hh_f = w_hh_ref[:Up, :Up]                       # (Up, Up) bf16
        w_hh_b = w_hh_ref[Up:, Up:]

    # ---- Peeled first fused step (h0 == 0 -> tanh(xproj)).  Its two halves are
    # exactly two of the four 'cat' pooling chunks: fwd@t=0 and bwd@t=T-1.
    x0 = jnp.concatenate([xp_ref[0][:, :Up], xp_ref[T - 1][:, Up:]], axis=-1)
    h_first = jnp.where(step_mask(0), jnp.tanh(x0.astype(jnp.float32)), 0.0)

    # ---- Fused fwd (t=i) / bwd (t=T-1-i) recurrence.
    def body(i, h):
        tb = T - 1 - i
        x_step = jnp.concatenate([xp_ref[i][:, :Up], xp_ref[tb][:, Up:]], axis=-1)
        h_b16 = h.astype(jnp.bfloat16)
        if fuse_dirs:
            hz = jnp.dot(h_b16, w_hh, preferred_element_type=jnp.float32)
        else:  # v5e-friendly: two 128-wide per-direction matmuls
            hz = jnp.concatenate(
                [jnp.dot(h_b16[:, :Up], w_hh_f, preferred_element_type=jnp.float32),
                 jnp.dot(h_b16[:, Up:], w_hh_b, preferred_element_type=jnp.float32)],
                axis=-1)
        h_new = jnp.tanh(x_step.astype(jnp.float32) + hz)
        return jnp.where(step_mask(i), h_new, h)          # packed-sequence semantics

    h_last = lax.fori_loop(1, T, body, h_first, unroll=unroll)

    # ---- pool_type == 'cat': [fwd@t=0, bwd@t=0, fwd@t=T-1, bwd@t=T-1]
    # step_mask(T-1) is exactly [lengths > T-1 | lengths > 0].
    h_last = jnp.where(step_mask(T - 1), h_last, 0.0)
    pooled = jnp.concatenate(
        [h_first[:, :Up],   # fwd @ t=0
         h_last[:, Up:],    # bwd @ t=0
         h_last[:, :Up],    # fwd @ t=T-1
         h_first[:, Up:]],  # bwd @ t=T-1
        axis=-1)                                           # (Bt, 4Up)

    out_ref[...] = (
        jnp.dot(pooled.astype(jnp.bfloat16), w_lin_ref[...],
                preferred_element_type=jnp.float32)
        + b_lin_ref[...])


def rnn_model_forward(token_ids, lengths, params, *,
                      B_tile=64, U_pad=128, C_pad=128, fuse_directions=True):
    """Pallas-backed equivalent of RNNModel.forward((token_ids, lengths))."""
    B, T = token_ids.shape
    F = params["embedding"].shape[-1]
    U = params["w_hh_f"].shape[0]
    C = params["b_lin"].shape[-1]
    assert U <= U_pad and C <= C_pad

    f32, bf16 = jnp.float32, jnp.bfloat16

    def r16(n):
        return ((n + 15) // 16) * 16

    # Adaptive batch tile: >=16 and a multiple of 16 (bf16 sublane packing);
    # tiny batches don't over-pad, large batches get the big tile.
    B_tile = r16(max(16, min(B_tile, r16(B))))
    B_pad = ((B + B_tile - 1) // B_tile) * B_tile

    # Time-major gather (avoids a separate (B,T,F) transpose); F left UNPADDED.
    emb_tbf = params["embedding"][token_ids.T].astype(f32)          # (T, B, F)
    emb_p = jnp.zeros((T, B_pad, F), f32).at[:, :B, :].set(emb_tbf)
    len_p = (jnp.zeros((B_pad, 1), jnp.int32)
             .at[:B, 0].set(lengths.astype(jnp.int32)))

    # [W_ih_f | W_ih_b] with each direction in its own U_pad lane group.
    w_ih = jnp.zeros((F, 2 * U_pad), f32)
    w_ih = w_ih.at[:, :U].set(params["w_ih_f"].astype(f32))
    w_ih = w_ih.at[:, U_pad:U_pad + U].set(params["w_ih_b"].astype(f32))
    b_cat = jnp.zeros((1, 2 * U_pad), f32)
    b_cat = b_cat.at[:, :U].set(params["b_f"].astype(f32))
    b_cat = b_cat.at[:, U_pad:U_pad + U].set(params["b_b"].astype(f32))

    # Block-diagonal hidden weights: one fused 2*U_pad-wide matmul per step.
    w_hh = jnp.zeros((2 * U_pad, 2 * U_pad), f32)
    w_hh = w_hh.at[:U, :U].set(params["w_hh_f"].astype(f32))
    w_hh = w_hh.at[U_pad:U_pad + U, U_pad:U_pad + U].set(params["w_hh_b"].astype(f32))

    # Final linear (4U, C) -> (4*U_pad, C_pad), rows grouped per pooled chunk.
    w_lin4 = params["w_lin"].reshape(4, U, C).astype(f32)
    w_lin = jnp.zeros((4, U_pad, C_pad), f32).at[:, :U, :C].set(w_lin4)
    w_lin = w_lin.reshape(4 * U_pad, C_pad)
    b_lin = jnp.zeros((1, C_pad), f32).at[:, :C].set(params["b_lin"].astype(f32))

    # bf16 MXU operands; accumulation stays f32 in-kernel.
    w_ih, w_hh, w_lin = w_ih.astype(bf16), w_hh.astype(bf16), w_lin.astype(bf16)

    unroll = True if T <= 16 else 4     # vreg-spill guard for long sequences

    # Rough VMEM footprint; only raise the scoped limit when it matters.
    weights_bytes = (F * 2 * U_pad + (2 * U_pad) ** 2 + 4 * U_pad * C_pad) * 2
    bias_bytes = (2 * U_pad + C_pad) * 4
    vmem_est = (2 * T * B_tile * F * 4            # emb block, double-buffered
                + T * B_tile * 2 * U_pad * 2      # bf16 xp scratch
                + 2 * (weights_bytes + bias_bytes)
                + 2 * B_tile * (C_pad * 4 + 4))   # out block + lengths
    vmem_limit = None
    if vmem_est > 16 * 1024 * 1024:
        vmem_limit = min(int(vmem_est * 1.25), 56 * 1024 * 1024)  # < v7x 64 MiB

    kernel = functools.partial(
        _rnn_bidir_cat_kernel, fuse_dirs=fuse_directions, unroll=unroll)

    grid = (B_pad // B_tile,)
    out_p = pl.pallas_call(
        kernel,
        out_shape=jax.ShapeDtypeStruct((B_pad, C_pad), jnp.float32),
        grid_spec=pltpu.PrefetchScalarGridSpec(
            num_scalar_prefetch=0,
            grid=grid,
            in_specs=[
                pl.BlockSpec((T, B_tile, F),             lambda b: (0, b, 0)),
                pl.BlockSpec((B_tile, 1),                lambda b: (b, 0)),
                pl.BlockSpec((F, 2 * U_pad),             lambda b: (0, 0)),
                pl.BlockSpec((1, 2 * U_pad),             lambda b: (0, 0)),
                pl.BlockSpec((2 * U_pad, 2 * U_pad),     lambda b: (0, 0)),
                pl.BlockSpec((4 * U_pad, C_pad),         lambda b: (0, 0)),
                pl.BlockSpec((1, C_pad),                 lambda b: (0, 0)),
            ],
            out_specs=pl.BlockSpec((B_tile, C_pad), lambda b: (b, 0)),
            scratch_shapes=[
                pltpu.VMEM((T, B_tile, 2 * U_pad), jnp.bfloat16),
            ],
        ),
        compiler_params=pltpu.CompilerParams(
            dimension_semantics=("parallel",),
            vmem_limit_bytes=vmem_limit),
    )(emb_p, len_p, w_ih, b_cat, w_hh, w_lin, b_lin)

    return out_p[:B, :C]


def _ref_forward(token_ids, lengths, params):
    """Pure-JAX f32 reference with explicit padded-output construction."""
    emb = params["embedding"][token_ids].astype(jnp.float32)  # (B, T, F)
    B, T, _ = emb.shape
    U = params["w_hh_f"].shape[0]
    lengths = lengths.astype(jnp.int32)

    def run(w_ih, w_hh, b, time_order):
        outs = [None] * T
        h = jnp.zeros((B, U), jnp.float32)
        for t in time_order:
            h_new = jnp.tanh(emb[:, t, :] @ w_ih + h @ w_hh + b)
            valid = (lengths > t)[:, None]
            h = jnp.where(valid, h_new, h)
            outs[t] = jnp.where(valid, h, 0.0)   # padded positions -> 0
        return jnp.stack(outs, axis=1)           # (B, T, U)

    out_f = run(params["w_ih_f"], params["w_hh_f"], params["b_f"], range(T))
    out_b = run(params["w_ih_b"], params["w_hh_b"], params["b_b"],
                range(T - 1, -1, -1))
    seq = jnp.concatenate([out_f, out_b], axis=-1)          # (B, T, 2U)
    pooled = jnp.concatenate([seq[:, 0, :], seq[:, T - 1, :]], axis=-1)  # (B, 4U)
    return pooled @ params["w_lin"] + params["b_lin"]


def _init_params(key, vocab, F, U, C):
    ks = jax.random.split(key, 10)
    bound = 1.0 / math.sqrt(U)
    u = lambda k, shape: jax.random.uniform(k, shape, jnp.float32, -bound, bound)
    return {
        "embedding": jax.random.normal(ks[0], (vocab, F), jnp.float32),
        # forward direction (weights stored pre-transposed: x @ W)
        "w_ih_f": u(ks[1], (F, U)),
        "w_hh_f": u(ks[2], (U, U)),
        "b_f":    u(ks[3], (1, U)),     # b_ih + b_hh folded together
        # backward direction
        "w_ih_b": u(ks[4], (F, U)),
        "w_hh_b": u(ks[5], (U, U)),
        "b_b":    u(ks[6], (1, U)),
        # final linear (4U -> C), pre-transposed
        "w_lin":  u(ks[7], (4 * U, C)),
        "b_lin":  u(ks[8], (1, C)),
    }


if __name__ == "__main__":
    key = jax.random.PRNGKey(0)
    k_tok, k_par, k_tok2, k_len2 = jax.random.split(key, 4)

    # Small config matching RNNModel defaults: num_features=10, units=25, n_classes=2.
    B, T = 2, 8
    VOCAB, F, U, C = 20, 10, 25, 2
    params = _init_params(k_par, VOCAB, F, U, C)

    token_ids = jax.random.randint(k_tok, (B, T), 0, VOCAB, dtype=jnp.int32)
    lengths = jnp.array([T, 5], dtype=jnp.int32)   # one full-length, one padded
    ref = _ref_forward(token_ids, lengths, params)

    # Fused 256-wide block-diagonal recurrence (v6e / v7x preferred path).
    out_fused = jax.block_until_ready(
        rnn_model_forward(token_ids, lengths, params, fuse_directions=True))
    assert out_fused.shape == (B, C)
    assert jnp.allclose(out_fused, ref, atol=6e-2, rtol=6e-2), (out_fused, ref)

    # Two 128-wide per-direction matmuls (v5e-friendly path).
    out_split = jax.block_until_ready(
        rnn_model_forward(token_ids, lengths, params, fuse_directions=False))
    assert jnp.allclose(out_split, ref, atol=6e-2, rtol=6e-2), (out_split, ref)

    # Larger batch: exercises batch padding, multi-step batch grid, varied lengths.
    B2, T2 = 40, 12
    tok2 = jax.random.randint(k_tok2, (B2, T2), 0, VOCAB, dtype=jnp.int32)
    len2 = jax.random.randint(k_len2, (B2,), 1, T2 + 1, dtype=jnp.int32)
    len2 = len2.at[0].set(T2).at[1].set(1)
    ref2 = _ref_forward(tok2, len2, params)
    out2 = jax.block_until_ready(
        rnn_model_forward(tok2, len2, params, B_tile=16))
    assert out2.shape == (B2, C)
    assert jnp.allclose(out2, ref2, atol=6e-2, rtol=6e-2), (
        float(jnp.max(jnp.abs(out2 - ref2))))

    print("KERNEL_OK")
</pallas_src>

<mosaic_0001>
module attributes {stable_mosaic.version = 11 : i64} {
  func.func @_rnn_bidir_cat_kernel(%arg0: i32, %arg1: memref<8x16x10xf32, #tpu.memory_space<vmem>>, %arg2: memref<16x1xi32, #tpu.memory_space<vmem>>, %arg3: memref<10x256xbf16, #tpu.memory_space<vmem>>, %arg4: memref<1x256xf32, #tpu.memory_space<vmem>>, %arg5: memref<256x256xbf16, #tpu.memory_space<vmem>>, %arg6: memref<512x128xbf16, #tpu.memory_space<vmem>>, %arg7: memref<1x128xf32, #tpu.memory_space<vmem>>, %arg8: memref<16x128xf32, #tpu.memory_space<vmem>>, %arg9: memref<8x16x256xbf16, #tpu.memory_space<vmem>>) attributes {dimension_semantics = [#tpu.dimension_semantics<parallel>], iteration_bounds = array<i64: 1>, scalar_prefetch = 0 : i64, scratch_operands = 1 : i64, tpu.core_type = #tpu.core_type<tc>, window_params = [{transform_indices = @transform_0, window_bounds = array<i64: 8, 16, 10>}, {transform_indices = @transform_1, window_bounds = array<i64: 16, 1>}, {pipeline_mode = #tpu.pipeline_mode<synchronous>, transform_indices = @transform_2, window_bounds = array<i64: 10, 256>}, {pipeline_mode = #tpu.pipeline_mode<synchronous>, transform_indices = @transform_3, window_bounds = array<i64: 1, 256>}, {pipeline_mode = #tpu.pipeline_mode<synchronous>, transform_indices = @transform_4, window_bounds = array<i64: 256, 256>}, {pipeline_mode = #tpu.pipeline_mode<synchronous>, transform_indices = @transform_5, window_bounds = array<i64: 512, 128>}, {pipeline_mode = #tpu.pipeline_mode<synchronous>, transform_indices = @transform_6, window_bounds = array<i64: 1, 128>}, {transform_indices = @transform_7, window_bounds = array<i64: 16, 128>}]} {
    %c0 = arith.constant 0 : index
    %c0_0 = arith.constant 0 : index
    %c0_1 = arith.constant 0 : index
    %0 = vector.load %arg1[%c0, %c0_0, %c0_1] : memref<8x16x10xf32, #tpu.memory_space<vmem>>, vector<8x16x10xf32>
    %1 = vector.shape_cast %0 : vector<8x16x10xf32> to vector<128x10xf32>
    %2 = arith.truncf %1 : vector<128x10xf32> to vector<128x10xbf16>
    %c0_2 = arith.constant 0 : index
    %c0_3 = arith.constant 0 : index
    %3 = vector.load %arg3[%c0_2, %c0_3] : memref<10x256xbf16, #tpu.memory_space<vmem>>, vector<10x256xbf16>
    %cst = arith.constant dense<0.000000e+00> : vector<128x256xf32>
    %4 = tpu.matmul %2, %3, %cst {dimension_numbers = #tpu.dot_dimension_numbers<[1], [0], [0], [1], [0, 0, 1, 1], [], []>} : vector<128x10xbf16>, vector<10x256xbf16>, vector<128x256xf32> -> vector<128x256xf32>
    %c0_4 = arith.constant 0 : index
    %c0_5 = arith.constant 0 : index
    %5 = vector.load %arg4[%c0_4, %c0_5] : memref<1x256xf32, #tpu.memory_space<vmem>>, vector<1x256xf32>
    %6 = vector.broadcast %5 : vector<1x256xf32> to vector<128x256xf32>
    %7 = arith.addf %4, %6 : vector<128x256xf32>
    %8 = vector.shape_cast %7 : vector<128x256xf32> to vector<8x16x256xf32>
    %9 = arith.truncf %8 : vector<8x16x256xf32> to vector<8x16x256xbf16>
    %c0_6 = arith.constant 0 : index
    %c0_7 = arith.constant 0 : index
    %c0_8 = arith.constant 0 : index
    %10 = vector.load %arg9[%c0_6, %c0_7, %c0_8] : memref<8x16x256xbf16, #tpu.memory_space<vmem>>, vector<8x16x256xbf16>
    tpu.vector_store %arg9[%c0_6, %c0_7, %c0_8], %9 {strides = array<i32>} : memref<8x16x256xbf16, #tpu.memory_space<vmem>>, vector<8x16x256xbf16>,
    %11 = tpu.iota {dimensions = array<i32: 1>} : vector<1x256xi32>
    %c128_i32 = arith.constant 128 : i32
    %12 = vector.broadcast %c128_i32 : i32 to vector<1x256xi32>
    %13 = arith.cmpi sge, %11, %12 : vector<1x256xi32>
    %14 = arith.extui %13 : vector<1x256xi1> to vector<1x256xi32>
    %c7_i32 = arith.constant 7 : i32
    %15 = vector.broadcast %c7_i32 : i32 to vector<1x256xi32>
    %16 = arith.muli %14, %15 : vector<1x256xi32>
    %c2_i32 = arith.constant 2 : i32
    %17 = vector.broadcast %c2_i32 : i32 to vector<1x256xi32>
    %18 = arith.muli %17, %14 : vector<1x256xi32>
    %c1_i32 = arith.constant 1 : i32
    %19 = vector.broadcast %c1_i32 : i32 to vector<1x256xi32>
    %20 = arith.subi %19, %18 : vector<1x256xi32>
    %c0_9 = arith.constant 0 : index
    %c0_10 = arith.constant 0 : index
    %21 = vector.load %arg2[%c0_9, %c0_10] : memref<16x1xi32, #tpu.memory_space<vmem>>, vector<16x1xi32>
    %22 = vector.shape_cast %21 : vector<16x1xi32> to vector<16x1xi32>
    %23 = vector.broadcast %22 : vector<16x1xi32> to vector<16x256xi32>
    %c0_11 = arith.constant 0 : index
    %c0_12 = arith.constant 0 : index
    %24 = vector.load %arg5[%c0_11, %c0_12] : memref<256x256xbf16, #tpu.memory_space<vmem>>, vector<256x256xbf16>
    %c0_13 = arith.constant 0 : index
    %c0_14 = arith.constant 0 : index
    %c0_15 = arith.constant 0 : index
    %25 = vector.load %arg9[%c0_13, %c0_14, %c0_15] : memref<8x16x256xbf16, #tpu.memory_space<vmem>>, vector<1x16x256xbf16>
    %26 = vector.shape_cast %25 : vector<1x16x256xbf16> to vector<16x256xbf16>
    %27 = vector.extract_strided_slice %26 {offsets = [0, 0], sizes = [16, 128], strides = [1, 1]} : vector<16x256xbf16> to vector<16x128xbf16>
    %c7 = arith.constant 7 : index
    %c0_16 = arith.constant 0 : index
    %c0_17 = arith.constant 0 : index
    %28 = vector.load %arg9[%c7, %c0_16, %c0_17] : memref<8x16x256xbf16, #tpu.memory_space<vmem>>, vector<1x16x256xbf16>
    %29 = vector.shape_cast %28 : vector<1x16x256xbf16> to vector<16x256xbf16>
    %30 = vector.extract_strided_slice %29 {offsets = [0, 128], sizes = [16, 128], strides = [1, 1]} : vector<16x256xbf16> to vector<16x128xbf16>
    %31 = tpu.concatenate %27, %30 in 1 : vector<16x128xbf16>, vector<16x128xbf16> -> vector<16x256xbf16>
    %c0_i32 = arith.constant 0 : i32
    %32 = vector.broadcast %c0_i32 : i32 to vector<1x256xi32>
    %33 = arith.muli %32, %20 : vector<1x256xi32>
    %34 = arith.addi %16, %33 : vector<1x256xi32>
    %35 = vector.broadcast %34 : vector<1x256xi32> to vector<16x256xi32>
    %36 = arith.cmpi sgt, %23, %35 : vector<16x256xi32>
    %37 = arith.extf %31 : vector<16x256xbf16> to vector<16x256xf32>
    %38 = math.tanh %37 : vector<16x256xf32>
    %cst_18 = arith.constant 0.000000e+00 : f32
    %39 = vector.broadcast %cst_18 : f32 to vector<16x256xf32>
    %40 = arith.select %36, %38, %39 : vector<16x256xi1>, vector<16x256xf32>
    %c1_i32_19 = arith.constant 1 : i32
    %c7_i32_20 = arith.constant 7 : i32
    %41 = arith.subi %c7_i32_20, %c1_i32_19 : i32
    %42 = arith.index_cast %c1_i32_19 : i32 to index
    %c0_21 = arith.constant 0 : index
    %c0_22 = arith.constant 0 : index
    %43 = vector.load %arg9[%42, %c0_21, %c0_22] : memref<8x16x256xbf16, #tpu.memory_space<vmem>>, vector<1x16x256xbf16>
    %44 = vector.shape_cast %43 : vector<1x16x256xbf16> to vector<16x256xbf16>
    %45 = vector.extract_strided_slice %44 {offsets = [0, 0], sizes = [16, 128], strides = [1, 1]} : vector<16x256xbf16> to vector<16x128xbf16>
    %46 = arith.index_cast %41 : i32 to index
    %c0_23 = arith.constant 0 : index
    %c0_24 = arith.constant 0 : index
    %47 = vector.load %arg9[%46, %c0_23, %c0_24] : memref<8x16x256xbf16, #tpu.memory_space<vmem>>, vector<1x16x256xbf16>
    %48 = vector.shape_cast %47 : vector<1x16x256xbf16> to vector<16x256xbf16>
    %49 = vector.extract_strided_slice %48 {offsets = [0, 128], sizes = [16, 128], strides = [1, 1]} : vector<16x256xbf16> to vector<16x128xbf16>
    %50 = tpu.concatenate %45, %49 in 1 : vector<16x128xbf16>, vector<16x128xbf16> -> vector<16x256xbf16>
    %51 = arith.truncf %40 : vector<16x256xf32> to vector<16x256xbf16>
    %cst_25 = arith.constant dense<0.000000e+00> : vector<16x256xf32>
    %52 = tpu.matmul %51, %24, %cst_25 {dimension_numbers = #tpu.dot_dimension_numbers<[1], [0], [0], [1], [0, 0, 1, 1], [], []>} : vector<16x256xbf16>, vector<256x256xbf16>, vector<16x256xf32> -> vector<16x256xf32>
    %53 = arith.extf %50 : vector<16x256xbf16> to vector<16x256xf32>
    %54 = arith.addf %53, %52 : vector<16x256xf32>
    %55 = math.tanh %54 : vector<16x256xf32>
    %56 = vector.broadcast %c1_i32_19 : i32 to vector<1x256xi32>
    %57 = arith.muli %56, %20 : vector<1x256xi32>
    %58 = arith.addi %16, %57 : vector<1x256xi32>
    %59 = vector.broadcast %58 : vector<1x256xi32> to vector<16x256xi32>
    %60 = arith.cmpi sgt, %23, %59 : vector<16x256xi32>
    %61 = arith.select %60, %55, %40 : vector<16x256xi1>, vector<16x256xf32>
    %c2_i32_26 = arith.constant 2 : i32
    %c7_i32_27 = arith.constant 7 : i32
    %62 = arith.subi %c7_i32_27, %c2_i32_26 : i32
    %63 = arith.index_cast %c2_i32_26 : i32 to index
    %c0_28 = arith.constant 0 : index
    %c0_29 = arith.constant 0 : index
    %64 = vector.load %arg9[%63, %c0_28, %c0_29] : memref<8x16x256xbf16, #tpu.memory_space<vmem>>, vector<1x16x256xbf16>
    %65 = vector.shape_cast %64 : vector<1x16x256xbf16> to vector<16x256xbf16>
    %66 = vector.extract_strided_slice %65 {offsets = [0, 0], sizes = [16, 128], strides = [1, 1]} : vector<16x256xbf16> to vector<16x128xbf16>
    %67 = arith.index_cast %62 : i32 to index
    %c0_30 = arith.constant 0 : index
    %c0_31 = arith.constant 0 : index
    %68 = vector.load %arg9[%67, %c0_30, %c0_31] : memref<8x16x256xbf16, #tpu.memory_space<vmem>>, vector<1x16x256xbf16>
    %69 = vector.shape_cast %68 : vector<1x16x256xbf16> to vector<16x256xbf16>
    %70 = vector.extract_strided_slice %69 {offsets = [0, 128], sizes = [16, 128], strides = [1, 1]} : vector<16x256xbf16> to vector<16x128xbf16>
    %71 = tpu.concatenate %66, %70 in 1 : vector<16x128xbf16>, vector<16x128xbf16> -> vector<16x256xbf16>
    %72 = arith.truncf %61 : vector<16x256xf32> to vector<16x256xbf16>
    %cst_32 = arith.constant dense<0.000000e+00> : vector<16x256xf32>
    %73 = tpu.matmul %72, %24, %cst_32 {dimension_numbers = #tpu.dot_dimension_numbers<[1], [0], [0], [1], [0, 0, 1, 1], [], []>} : vector<16x256xbf16>, vector<256x256xbf16>, vector<16x256xf32> -> vector<16x256xf32>
    %74 = arith.extf %71 : vector<16x256xbf16> to vector<16x256xf32>
    %75 = arith.addf %74, %73 : vector<16x256xf32>
    %76 = math.tanh %75 : vector<16x256xf32>
    %77 = vector.broadcast %c2_i32_26 : i32 to vector<1x256xi32>
    %78 = arith.muli %77, %20 : vector<1x256xi32>
    %79 = arith.addi %16, %78 : vector<1x256xi32>
    %80 = vector.broadcast %79 : vector<1x256xi32> to vector<16x256xi32>
    %81 = arith.cmpi sgt, %23, %80 : vector<16x256xi32>
    %82 = arith.select %81, %76, %61 : vector<16x256xi1>, vector<16x256xf32>
    %c3_i32 = arith.constant 3 : i32
    %c7_i32_33 = arith.constant 7 : i32
    %83 = arith.subi %c7_i32_33, %c3_i32 : i32
    %84 = arith.index_cast %c3_i32 : i32 to index
    %c0_34 = arith.constant 0 : index
    %c0_35 = arith.constant 0 : index
    %85 = vector.load %arg9[%84, %c0_34, %c0_35] : memref<8x16x256xbf16, #tpu.memory_space<vmem>>, vector<1x16x256xbf16>
    %86 = vector.shape_cast %85 : vector<1x16x256xbf16> to vector<16x256xbf16>
    %87 = vector.extract_strided_slice %86 {offsets = [0, 0], sizes = [16, 128], strides = [1, 1]} : vector<16x256xbf16> to vector<16x128xbf16>
    %88 = arith.index_cast %83 : i32 to index
    %c0_36 = arith.constant 0 : index
    %c0_37 = arith.constant 0 : index
    %89 = vector.load %arg9[%88, %c0_36, %c0_37] : memref<8x16x256xbf16, #tpu.memory_space<vmem>>, vector<1x16x256xbf16>
    %90 = vector.shape_cast %89 : vector<1x16x256xbf16> to vector<16x256xbf16>
    %91 = vector.extract_strided_slice %90 {offsets = [0, 128], sizes = [16, 128], strides = [1, 1]} : vector<16x256xbf16> to vector<16x128xbf16>
    %92 = tpu.concatenate %87, %91 in 1 : vector<16x128xbf16>, vector<16x128xbf16> -> vector<16x256xbf16>
    %93 = arith.truncf %82 : vector<16x256xf32> to vector<16x256xbf16>
    %cst_38 = arith.constant dense<0.000000e+00> : vector<16x256xf32>
    %94 = tpu.matmul %93, %24, %cst_38 {dimension_numbers = #tpu.dot_dimension_numbers<[1], [0], [0], [1], [0, 0, 1, 1], [], []>} : vector<16x256xbf16>, vector<256x256xbf16>, vector<16x256xf32> -> vector<16x256xf32>
    %95 = arith.extf %92 : vector<16x256xbf16> to vector<16x256xf32>
    %96 = arith.addf %95, %94 : vector<16x256xf32>
    %97 = math.tanh %96 : vector<16x256xf32>
    %98 = vector.broadcast %c3_i32 : i32 to vector<1x256xi32>
    %99 = arith.muli %98, %20 : vector<1x256xi32>
    %100 = arith.addi %16, %99 : vector<1x256xi32>
    %101 = vector.broadcast %100 : vector<1x256xi32> to vector<16x256xi32>
    %102 = arith.cmpi sgt, %23, %101 : vector<16x256xi32>
    %103 = arith.select %102, %97, %82 : vector<16x256xi1>, vector<16x256xf32>
    %c4_i32 = arith.constant 4 : i32
    %c7_i32_39 = arith.constant 7 : i32
    %104 = arith.subi %c7_i32_39, %c4_i32 : i32
    %105 = arith.index_cast %c4_i32 : i32 to index
    %c0_40 = arith.constant 0 : index
    %c0_41 = arith.constant 0 : index
    %106 = vector.load %arg9[%105, %c0_40, %c0_41] : memref<8x16x256xbf16, #tpu.memory_space<vmem>>, vector<1x16x256xbf16>
    %107 = vector.shape_cast %106 : vector<1x16x256xbf16> to vector<16x256xbf16>
    %108 = vector.extract_strided_slice %107 {offsets = [0, 0], sizes = [16, 128], strides = [1, 1]} : vector<16x256xbf16> to vector<16x128xbf16>
    %109 = arith.index_cast %104 : i32 to index
    %c0_42 = arith.constant 0 : index
    %c0_43 = arith.constant 0 : index
    %110 = vector.load %arg9[%109, %c0_42, %c0_43] : memref<8x16x256xbf16, #tpu.memory_space<vmem>>, vector<1x16x256xbf16>
    %111 = vector.shape_cast %110 : vector<1x16x256xbf16> to vector<16x256xbf16>
    %112 = vector.extract_strided_slice %111 {offsets = [0, 128], sizes = [16, 128], strides = [1, 1]} : vector<16x256xbf16> to vector<16x128xbf16>
    %113 = tpu.concatenate %108, %112 in 1 : vector<16x128xbf16>, vector<16x128xbf16> -> vector<16x256xbf16>
    %114 = arith.truncf %103 : vector<16x256xf32> to vector<16x256xbf16>
    %cst_44 = arith.constant dense<0.000000e+00> : vector<16x256xf32>
    %115 = tpu.matmul %114, %24, %cst_44 {dimension_numbers = #tpu.dot_dimension_numbers<[1], [0], [0], [1], [0, 0, 1, 1], [], []>} : vector<16x256xbf16>, vector<256x256xbf16>, vector<16x256xf32> -> vector<16x256xf32>
    %116 = arith.extf %113 : vector<16x256xbf16> to vector<16x256xf32>
    %117 = arith.addf %116, %115 : vector<16x256xf32>
    %118 = math.tanh %117 : vector<16x256xf32>
    %119 = vector.broadcast %c4_i32 : i32 to vector<1x256xi32>
    %120 = arith.muli %119, %20 : vector<1x256xi32>
    %121 = arith.addi %16, %120 : vector<1x256xi32>
    %122 = vector.broadcast %121 : vector<1x256xi32> to vector<16x256xi32>
    %123 = arith.cmpi sgt, %23, %122 : vector<16x256xi32>
    %124 = arith.select %123, %118, %103 : vector<16x256xi1>, vector<16x256xf32>
    %c5_i32 = arith.constant 5 : i32
    %c7_i32_45 = arith.constant 7 : i32
    %125 = arith.subi %c7_i32_45, %c5_i32 : i32
    %126 = arith.index_cast %c5_i32 : i32 to index
    %c0_46 = arith.constant 0 : index
    %c0_47 = arith.constant 0 : index
    %127 = vector.load %arg9[%126, %c0_46, %c0_47] : memref<8x16x256xbf16, #tpu.memory_space<vmem>>, vector<1x16x256xbf16>
    %128 = vector.shape_cast %127 : vector<1x16x256xbf16> to vector<16x256xbf16>
    %129 = vector.extract_strided_slice %128 {offsets = [0, 0], sizes = [16, 128], strides = [1, 1]} : vector<16x256xbf16> to vector<16x128xbf16>
    %130 = arith.index_cast %125 : i32 to index
    %c0_48 = arith.constant 0 : index
    %c0_49 = arith.constant 0 : index
    %131 = vector.load %arg9[%130, %c0_48, %c0_49] : memref<8x16x256xbf16, #tpu.memory_space<vmem>>, vector<1x16x256xbf16>
    %132 = vector.shape_cast %131 : vector<1x16x256xbf16> to vector<16x256xbf16>
    %133 = vector.extract_strided_slice %132 {offsets = [0, 128], sizes = [16, 128], strides = [1, 1]} : vector<16x256xbf16> to vector<16x128xbf16>
    %134 = tpu.concatenate %129, %133 in 1 : vector<16x128xbf16>, vector<16x128xbf16> -> vector<16x256xbf16>
    %135 = arith.truncf %124 : vector<16x256xf32> to vector<16x256xbf16>
    %cst_50 = arith.constant dense<0.000000e+00> : vector<16x256xf32>
    %136 = tpu.matmul %135, %24, %cst_50 {dimension_numbers = #tpu.dot_dimension_numbers<[1], [0], [0], [1], [0, 0, 1, 1], [], []>} : vector<16x256xbf16>, vector<256x256xbf16>, vector<16x256xf32> -> vector<16x256xf32>
    %137 = arith.extf %134 : vector<16x256xbf16> to vector<16x256xf32>
    %138 = arith.addf %137, %136 : vector<16x256xf32>
    %139 = math.tanh %138 : vector<16x256xf32>
    %140 = vector.broadcast %c5_i32 : i32 to vector<1x256xi32>
    %141 = arith.muli %140, %20 : vector<1x256xi32>
    %142 = arith.addi %16, %141 : vector<1x256xi32>
    %143 = vector.broadcast %142 : vector<1x256xi32> to vector<16x256xi32>
    %144 = arith.cmpi sgt, %23, %143 : vector<16x256xi32>
    %145 = arith.select %144, %139, %124 : vector<16x256xi1>, vector<16x256xf32>
    %c6_i32 = arith.constant 6 : i32
    %c7_i32_51 = arith.constant 7 : i32
    %146 = arith.subi %c7_i32_51, %c6_i32 : i32
    %147 = arith.index_cast %c6_i32 : i32 to index
    %c0_52 = arith.constant 0 : index
    %c0_53 = arith.constant 0 : index
    %148 = vector.load %arg9[%147, %c0_52, %c0_53] : memref<8x16x256xbf16, #tpu.memory_space<vmem>>, vector<1x16x256xbf16>
    %149 = vector.shape_cast %148 : vector<1x16x256xbf16> to vector<16x256xbf16>
    %150 = vector.extract_strided_slice %149 {offsets = [0, 0], sizes = [16, 128], strides = [1, 1]} : vector<16x256xbf16> to vector<16x128xbf16>
    %151 = arith.index_cast %146 : i32 to index
    %c0_54 = arith.constant 0 : index
    %c0_55 = arith.constant 0 : index
    %152 = vector.load %arg9[%151, %c0_54, %c0_55] : memref<8x16x256xbf16, #tpu.memory_space<vmem>>, vector<1x16x256xbf16>
    %153 = vector.shape_cast %152 : vector<1x16x256xbf16> to vector<16x256xbf16>
    %154 = vector.extract_strided_slice %153 {offsets = [0, 128], sizes = [16, 128], strides = [1, 1]} : vector<16x256xbf16> to vector<16x128xbf16>
    %155 = tpu.concatenate %150, %154 in 1 : vector<16x128xbf16>, vector<16x128xbf16> -> vector<16x256xbf16>
    %156 = arith.truncf %145 : vector<16x256xf32> to vector<16x256xbf16>
    %cst_56 = arith.constant dense<0.000000e+00> : vector<16x256xf32>
    %157 = tpu.matmul %156, %24, %cst_56 {dimension_numbers = #tpu.dot_dimension_numbers<[1], [0], [0], [1], [0, 0, 1, 1], [], []>} : vector<16x256xbf16>, vector<256x256xbf16>, vector<16x256xf32> -> vector<16x256xf32>
    %158 = arith.extf %155 : vector<16x256xbf16> to vector<16x256xf32>
    %159 = arith.addf %158, %157 : vector<16x256xf32>
    %160 = math.tanh %159 : vector<16x256xf32>
    %161 = vector.broadcast %c6_i32 : i32 to vector<1x256xi32>
    %162 = arith.muli %161, %20 : vector<1x256xi32>
    %163 = arith.addi %16, %162 : vector<1x256xi32>
    %164 = vector.broadcast %163 : vector<1x256xi32> to vector<16x256xi32>
    %165 = arith.cmpi sgt, %23, %164 : vector<16x256xi32>
    %166 = arith.select %165, %160, %145 : vector<16x256xi1>, vector<16x256xf32>
    %c7_i32_57 = arith.constant 7 : i32
    %c7_i32_58 = arith.constant 7 : i32
    %167 = arith.subi %c7_i32_58, %c7_i32_57 : i32
    %168 = arith.index_cast %c7_i32_57 : i32 to index
    %c0_59 = arith.constant 0 : index
    %c0_60 = arith.constant 0 : index
    %169 = vector.load %arg9[%168, %c0_59, %c0_60] : memref<8x16x256xbf16, #tpu.memory_space<vmem>>, vector<1x16x256xbf16>
    %170 = vector.shape_cast %169 : vector<1x16x256xbf16> to vector<16x256xbf16>
    %171 = vector.extract_strided_slice %170 {offsets = [0, 0], sizes = [16, 128], strides = [1, 1]} : vector<16x256xbf16> to vector<16x128xbf16>
    %172 = arith.index_cast %167 : i32 to index
    %c0_61 = arith.constant 0 : index
    %c0_62 = arith.constant 0 : index
    %173 = vector.load %arg9[%172, %c0_61, %c0_62] : memref<8x16x256xbf16, #tpu.memory_space<vmem>>, vector<1x16x256xbf16>
    %174 = vector.shape_cast %173 : vector<1x16x256xbf16> to vector<16x256xbf16>
    %175 = vector.extract_strided_slice %174 {offsets = [0, 128], sizes = [16, 128], strides = [1, 1]} : vector<16x256xbf16> to vector<16x128xbf16>
    %176 = tpu.concatenate %171, %175 in 1 : vector<16x128xbf16>, vector<16x128xbf16> -> vector<16x256xbf16>
    %177 = arith.truncf %166 : vector<16x256xf32> to vector<16x256xbf16>
    %cst_63 = arith.constant dense<0.000000e+00> : vector<16x256xf32>
    %178 = tpu.matmul %177, %24, %cst_63 {dimension_numbers = #tpu.dot_dimension_numbers<[1], [0], [0], [1], [0, 0, 1, 1], [], []>} : vector<16x256xbf16>, vector<256x256xbf16>, vector<16x256xf32> -> vector<16x256xf32>
    %179 = arith.extf %176 : vector<16x256xbf16> to vector<16x256xf32>
    %180 = arith.addf %179, %178 : vector<16x256xf32>
    %181 = math.tanh %180 : vector<16x256xf32>
    %182 = vector.broadcast %c7_i32_57 : i32 to vector<1x256xi32>
    %183 = arith.muli %182, %20 : vector<1x256xi32>
    %184 = arith.addi %16, %183 : vector<1x256xi32>
    %185 = vector.broadcast %184 : vector<1x256xi32> to vector<16x256xi32>
    %186 = arith.cmpi sgt, %23, %185 : vector<16x256xi32>
    %187 = arith.select %186, %181, %166 : vector<16x256xi1>, vector<16x256xf32>
    %c7_i32_64 = arith.constant 7 : i32
    %c7_i32_65 = arith.constant 7 : i32
    %188 = vector.broadcast %c7_i32_65 : i32 to vector<1x256xi32>
    %189 = arith.muli %188, %20 : vector<1x256xi32>
    %190 = arith.addi %16, %189 : vector<1x256xi32>
    %191 = vector.broadcast %190 : vector<1x256xi32> to vector<16x256xi32>
    %192 = arith.cmpi sgt, %23, %191 : vector<16x256xi32>
    %cst_66 = arith.constant 0.000000e+00 : f32
    %193 = vector.broadcast %cst_66 : f32 to vector<16x256xf32>
    %194 = arith.select %192, %187, %193 : vector<16x256xi1>, vector<16x256xf32>
    %195 = vector.extract_strided_slice %40 {offsets = [0, 0], sizes = [16, 128], strides = [1, 1]} : vector<16x256xf32> to vector<16x128xf32>
    %196 = vector.extract_strided_slice %194 {offsets = [0, 128], sizes = [16, 128], strides = [1, 1]} : vector<16x256xf32> to vector<16x128xf32>
    %197 = vector.extract_strided_slice %194 {offsets = [0, 0], sizes = [16, 128], strides = [1, 1]} : vector<16x256xf32> to vector<16x128xf32>
    %198 = vector.extract_strided_slice %40 {offsets = [0, 128], sizes = [16, 128], strides = [1, 1]} : vector<16x256xf32> to vector<16x128xf32>
    %199 = tpu.concatenate %195, %196, %197, %198 in 1 : vector<16x128xf32>, vector<16x128xf32>, vector<16x128xf32>, vector<16x128xf32> -> vector<16x512xf32>
    %200 = arith.truncf %199 : vector<16x512xf32> to vector<16x512xbf16>
    %c0_67 = arith.constant 0 : index
    %c0_68 = arith.constant 0 : index
    %201 = vector.load %arg6[%c0_67, %c0_68] : memref<512x128xbf16, #tpu.memory_space<vmem>>, vector<512x128xbf16>
    %cst_69 = arith.constant dense<0.000000e+00> : vector<16x128xf32>
    %202 = tpu.matmul %200, %201, %cst_69 {dimension_numbers = #tpu.dot_dimension_numbers<[1], [0], [0], [1], [0, 0, 1, 1], [], []>} : vector<16x512xbf16>, vector<512x128xbf16>, vector<16x128xf32> -> vector<16x128xf32>
    %c0_70 = arith.constant 0 : index
    %c0_71 = arith.constant 0 : index
    %203 = vector.load %arg7[%c0_70, %c0_71] : memref<1x128xf32, #tpu.memory_space<vmem>>, vector<1x128xf32>
    %204 = vector.broadcast %203 : vector<1x128xf32> to vector<16x128xf32>
    %205 = arith.addf %202, %204 : vector<16x128xf32>
    %c0_72 = arith.constant 0 : index
    %c0_73 = arith.constant 0 : index
    %206 = vector.load %arg8[%c0_72, %c0_73] : memref<16x128xf32, #tpu.memory_space<vmem>>, vector<16x128xf32>
    tpu.vector_store %arg8[%c0_72, %c0_73], %205 {strides = array<i32>} : memref<16x128xf32, #tpu.memory_space<vmem>>, vector<16x128xf32>,
    return
  }
  func.func @transform_0(%arg0: i32) -> (i32, i32, i32) {
    %c0_i32 = arith.constant 0 : i32
    %c0_i32_0 = arith.constant 0 : i32
    %c0_i32_1 = arith.constant 0 : i32
    return %c0_i32, %arg0, %c0_i32_0 : i32, i32, i32
  }
  func.func @transform_1(%arg0: i32) -> (i32, i32) {
    %c0_i32 = arith.constant 0 : i32
    %c0_i32_0 = arith.constant 0 : i32
    return %arg0, %c0_i32 : i32, i32
  }
  func.func @transform_2(%arg0: i32) -> (i32, i32) {
    %c0_i32 = arith.constant 0 : i32
    %c0_i32_0 = arith.constant 0 : i32
    %c0_i32_1 = arith.constant 0 : i32
    return %c0_i32, %c0_i32_0 : i32, i32
  }
  func.func @transform_3(%arg0: i32) -> (i32, i32) {
    %c0_i32 = arith.constant 0 : i32
    %c0_i32_0 = arith.constant 0 : i32
    %c0_i32_1 = arith.constant 0 : i32
    return %c0_i32, %c0_i32_0 : i32, i32
  }
  func.func @transform_4(%arg0: i32) -> (i32, i32) {
    %c0_i32 = arith.constant 0 : i32
    %c0_i32_0 = arith.constant 0 : i32
    %c0_i32_1 = arith.constant 0 : i32
    return %c0_i32, %c0_i32_0 : i32, i32
  }
  func.func @transform_5(%arg0: i32) -> (i32, i32) {
    %c0_i32 = arith.constant 0 : i32
    %c0_i32_0 = arith.constant 0 : i32
    %c0_i32_1 = arith.constant 0 : i32
    return %c0_i32, %c0_i32_0 : i32, i32
  }
  func.func @transform_6(%arg0: i32) -> (i32, i32) {
    %c0_i32 = arith.constant 0 : i32
    %c0_i32_0 = arith.constant 0 : i32
    %c0_i32_1 = arith.constant 0 : i32
    return %c0_i32, %c0_i32_0 : i32, i32
  }
  func.func @transform_7(%arg0: i32) -> (i32, i32) {
    %c0_i32 = arith.constant 0 : i32
    %c0_i32_0 = arith.constant 0 : i32
    return %arg0, %c0_i32 : i32, i32
  }
}

</mosaic_0001>

<llo_original>
// kernel: tpu_custom_call.1
$region0: #{tpu_custom_call.1}
  #allocation0 [shape = 'u32[]', space=smem, size = 0x4, offset = 0x4, fixed_abs, tag = 'smem constant byte address 0x4 - core index']
  #allocation1 [shape = 'u32[144,128]{1,0:T(1,128)}', space=vmem, size = 0x12000, scoped, tag = 'internal scratch']
  #allocation2 [shape = 'bf16[8,16,256]{2,1,0:T(8,128)(2,1)}', space=vmem, size = 0x10000, scoped, tag = 'scratch operand']
  %s0 = inlined_call_operand.vmem [shape: f32[8,16,10], index: 0, kind: input, shape index: {}]
  %s1 = inlined_call_operand.vmem [shape: s32[16,1], index: 1, kind: input, shape index: {}]
  %s2 = inlined_call_operand.vmem [shape: bf16[10,256], index: 2, kind: input, shape index: {}]
  %s3 = inlined_call_operand.vmem [shape: f32[1,256], index: 3, kind: input, shape index: {}]
  %s4 = inlined_call_operand.hbm [shape: bf16[256,256], index: 4, kind: input, shape index: {}]
  %s5 = inlined_call_operand.hbm [shape: bf16[512,128], index: 5, kind: input, shape index: {}]
  %s6 = inlined_call_operand.vmem [shape: f32[1,128], index: 6, kind: input, shape index: {}]
  %s7 = inlined_call_operand.hbm [shape: f32[16,128], index: 7, kind: output, shape index: {}]
  %s8 = sld [smem:[#allocation0]]
  $region46: #{tpu_custom_call.1} parent=0
    _
  %s10 = ssub.s32 1, %s8
  %s11 = scalar_select 0, %s10, %s8
  $region1: #{tpu_custom_call.1} parent=0
    #allocation3 [shape = 'u8[131072]{0}', space=vmem, size = 0x20000, scoped, tag = 'input window, operand 4, single buffered']
    #allocation4 [shape = 's32[1]{0}', space=sflag, size = 0x4, scoped, tag = 'scoped memory for tpu_custom_call.1']
    #allocation5 [shape = 's32[1]{0}', space=sflag, size = 0x4, scoped, tag = 'scoped memory for tpu_custom_call.1']
    #allocation6 [shape = 'u8[131072]{0}', space=vmem, size = 0x20000, scoped, tag = 'input window, operand 5, single buffered']
    #allocation7 [shape = 's32[1]{0}', space=sflag, size = 0x4, scoped, tag = 'scoped memory for tpu_custom_call.1']
    #allocation8 [shape = 'u8[8192]{0}', space=vmem, size = 0x2000, scoped, tag = 'output window, operand 0, single buffered']
    %12 = vsyncpa [#allocation4], 0
    %13 = vsyncpa [#allocation7], 0
    %14 = vsyncpa [#allocation5], 0
    // Predicated region
    $region2: #{tpu_custom_call.1} parent=1 // pred_check
      _
    $region3: #{tpu_custom_call.1} parent=1 // pred_check_branch
      %16 = sbr.rel (0) target = $region5
    $region4: #{tpu_custom_call.1} parent=1 // pred_region
      _
    $region5: #{tpu_custom_call.1} parent=1 // pred_fallthru
      _
    // Predicated region
    $region6: #{tpu_custom_call.1} parent=1 // pred_check
      _
    $region7: #{tpu_custom_call.1} parent=1 // pred_check_branch
      %18 = sbr.rel (0) target = $region9
    $region8: #{tpu_custom_call.1} parent=1 // pred_region
      _
    $region9: #{tpu_custom_call.1} parent=1 // pred_fallthru
      _
    // Predicated region
    $region10: #{tpu_custom_call.1} parent=1 // pred_check
      _
    $region11: #{tpu_custom_call.1} parent=1 // pred_check_branch
      %20 = sbr.rel (0) target = $region13
    $region12: #{tpu_custom_call.1} parent=1 // pred_region
      _
    $region13: #{tpu_custom_call.1} parent=1 // pred_fallthru
      _
    // Predicated region
    $region14: #{tpu_custom_call.1} parent=1 // pred_check
      _
    $region15: #{tpu_custom_call.1} parent=1 // pred_check_branch
      %22 = sbr.rel (0) target = $region17
    $region16: #{tpu_custom_call.1} parent=1 // pred_region
      _
    $region17: #{tpu_custom_call.1} parent=1 // pred_fallthru
      _
    // Predicated region
    $region18: #{tpu_custom_call.1} parent=1 // pred_check
      _
    $region19: #{tpu_custom_call.1} parent=1 // pred_check_branch
      %24 = sbr.rel (0) target = $region21
    $region20: #{tpu_custom_call.1} parent=1 // pred_region
      %s26 = ssub.s32 4096, 4096
      %27 = vsyncadd [#allocation4], %s26
      %s28 = sshll.u32 [#allocation3], 4
      %s29 = int_to_ptr.vmem [resolvable:$true] %s28
      %34 = dma.hbm_to_vmem [thread:$0]  %s4, 4096, %s29, [#allocation4], 128, 128, 8
    $region21: #{tpu_custom_call.1} parent=1 // pred_fallthru
      _
    // Predicated region
    $region22: #{tpu_custom_call.1} parent=1 // pred_check
      _
    $region23: #{tpu_custom_call.1} parent=1 // pred_check_branch
      %36 = sbr.rel (0) target = $region25
    $region24: #{tpu_custom_call.1} parent=1 // pred_region
      %s38 = ssub.s32 4096, 4096
      %39 = vsyncadd [#allocation7], %s38
      %s40 = sshll.u32 [#allocation6], 4
      %s41 = int_to_ptr.vmem [resolvable:$true] %s40
      %46 = dma.hbm_to_vmem [thread:$0]  %s5, 4096, %s41, [#allocation7], 64, 64, 4
    $region25: #{tpu_custom_call.1} parent=1 // pred_fallthru
      _
    // Predicated region
    $region26: #{tpu_custom_call.1} parent=1 // pred_check
      _
    $region27: #{tpu_custom_call.1} parent=1 // pred_check_branch
      %48 = sbr.rel (0) target = $region29
    $region28: #{tpu_custom_call.1} parent=1 // pred_region
      _
    $region29: #{tpu_custom_call.1} parent=1 // pred_fallthru
      _
    // Predicated region
    $region30: #{tpu_custom_call.1} parent=1 // pred_check
      _
    $region31: #{tpu_custom_call.1} parent=1 // pred_check_branch
      %50 = sbr.rel (0) target = $region33
    $region32: #{tpu_custom_call.1} parent=1 // pred_region
      %51 = dma.done [#allocation4], 4096
    $region33: #{tpu_custom_call.1} parent=1 // pred_fallthru
      _
    // Predicated region
    $region34: #{tpu_custom_call.1} parent=1 // pred_check
      _
    $region35: #{tpu_custom_call.1} parent=1 // pred_check_branch
      %53 = sbr.rel (0) target = $region37
    $region36: #{tpu_custom_call.1} parent=1 // pred_region
      %54 = dma.done [#allocation7], 4096
    $region37: #{tpu_custom_call.1} parent=1 // pred_fallthru
      _
    %v56 = vld [vmem:[%s0] sm:$0xff]
    %v57 = vld [vmem:[%s0 + $0x8] sm:$0xff]
    %v58 = vld [vmem:[%s0 + $0x10] sm:$0xff]
    %v59 = vld [vmem:[%s0 + $0x18] sm:$0xff]
    %v60 = vld [vmem:[%s0 + $0x20] sm:$0xff]
    %v61 = vld [vmem:[%s0 + $0x28] sm:$0xff]
    %v62 = vld [vmem:[%s0 + $0x30] sm:$0xff]
    %v63 = vld [vmem:[%s0 + $0x38] sm:$0xff]
    %v64 = vld [vmem:[%s0 + $0x40] sm:$0xff]
    %v65 = vld [vmem:[%s0 + $0x48] sm:$0xff]
    %v66 = vld [vmem:[%s0 + $0x50] sm:$0xff]
    %v67 = vld [vmem:[%s0 + $0x58] sm:$0xff]
    %v68 = vld [vmem:[%s0 + $0x60] sm:$0xff]
    %v69 = vld [vmem:[%s0 + $0x68] sm:$0xff]
    %v70 = vld [vmem:[%s0 + $0x70] sm:$0xff]
    %v71 = vld [vmem:[%s0 + $0x78] sm:$0xff]
    %v72 = vpack.c.bf16 %v57, %v56
    %v73 = vpack.c.bf16 %v59, %v58
    %v74 = vpack.c.bf16 %v61, %v60
    %v75 = vpack.c.bf16 %v63, %v62
    %v76 = vpack.c.bf16 %v65, %v64
    %v77 = vpack.c.bf16 %v67, %v66
    %v78 = vpack.c.bf16 %v69, %v68
    %v79 = vpack.c.bf16 %v71, %v70
    %v80 = vld [vmem:[%s2] sm:$0xff]
    %v81 = vld [vmem:[%s2 + $0x8] sm:$0x11]
    %v82 = vld [vmem:[%s3] sm:$0x3]
    %v84 = vlaneseq
    %v85 = vshrl.u32 %v84, 7
    %v86 = vsub.s32 0, %v85
    %v87 = vrot.slane %v82, %v86
    %v88 = vlaneseq
    %v89 = vshrl.u32 %v88, 7
    %v90 = vsub.s32 1, %v89
    %v91 = vrot.slane %v82, %v90
    %v96 = vunpack.c.l.b16 %v80
    %v97 = vunpack.c.h.b16 %v80
    %v98 = vunpack.c.l.b16 %v81
    %v99 = vunpack.c.h.b16 %v81
    %v100 = vpack.c.b16 %v98, %v96
    %v101 = vpack.c.b16 %v99, %v97
    %vm102 = vcmask 80896
    %v104 = vsel %vm102, %v72, 0
    %v107 = vsel %vm102, %v73, 0
    %v110 = vsel %vm102, %v74, 0
    %v113 = vsel %vm102, %v75, 0
    %v116 = vsel %vm102, %v76, 0
    %v119 = vsel %vm102, %v77, 0
    %v122 = vsel %vm102, %v78, 0
    %v125 = vsel %vm102, %v79, 0
    %vm127 = vcmask 1044480
    %v129 = vsel %vm127, %v100, 0
    %v132 = vsel %vm127, %v101, 0
    %134 = vmatprep.subr.bf16.mxu0 0
    %135 = vmatpush1.bf16.msra.mxu0 0
    %136 = vmatprep.subr.bf16.mxu0 0
    %137 = vmatpush1.bf16.msra.mxu0 0
    %138 = vmatprep.subr.bf16.mxu0 0
    %139 = vmatpush1.bf16.msra.mxu0 0
    %140 = vmatprep.subr.bf16.mxu0 0
    %141 = vmatpush1.bf16.msra.mxu0 0
    %142 = vmatprep.subr.bf16.mxu0 0
    %143 = vmatpush1.bf16.msra.mxu0 0
    %144 = vmatprep.subr.bf16.mxu0 0
    %145 = vmatpush1.bf16.msra.mxu0 0
    %146 = vmatprep.subr.bf16.mxu0 0
    %147 = vmatpush1.bf16.msra.mxu0 0
    %148 = vmatprep.subr.bf16.mxu0 %v132
    %149 = vmatpush1.bf16.msra.mxu0 %v129
    %150 = vmatprep.subr.bf16.mxu0 0
    %151 = vmatpush2.bf16.msra.mxu0 0
    %152 = vmatprep.subr.bf16.mxu0 0
    %153 = vmatpush2.bf16.msra.mxu0 0
    %154 = vmatprep.subr.bf16.mxu0 0
    %155 = vmatpush2.bf16.msra.mxu0 0
    %156 = vmatprep.subr.bf16.mxu0 0
    %157 = vmatpush2.bf16.msra.mxu0 0
    %158 = vmatprep.subr.bf16.mxu0 0
    %159 = vmatpush2.bf16.msra.mxu0 0
    %160 = vmatprep.subr.bf16.mxu0 0
    %161 = vmatpush2.bf16.msra.mxu0 0
    %162 = vmatprep.subr.bf16.mxu0 0
    %163 = vmatpush2.bf16.msra.mxu0 0
    %164 = vmatprep.subr.bf16.mxu0 0
    %165 = vmatpush2.bf16.msra.mxu0 0
    %166 = vmatprep.mubr.bf16.mxu0 0
    %167 = vmatmul.mubr.bf16.gmra.mxu0 %v104
    %v168 = vpop.f32.mrf.mxu0
    %v169 = vadd.f32 %v87, %v168
    %v170 = vpop.f32.mrf.mxu0
    %v171 = vadd.f32 %v91, %v170
    %v172 = vpop.f32.mrf.mxu0
    %v173 = vadd.f32 %v87, %v172
    %v174 = vpop.f32.mrf.mxu0
    %v175 = vadd.f32 %v91, %v174
    %176 = vmatprep.mubr.bf16.mxu0 0
    %177 = vmatmul.mubr.bf16.gmra.mxu0 %v107
    %v178 = vpop.f32.mrf.mxu0
    %v179 = vadd.f32 %v87, %v178
    %v180 = vpop.f32.mrf.mxu0
    %v181 = vadd.f32 %v91, %v180
    %v182 = vpop.f32.mrf.mxu0
    %v183 = vadd.f32 %v87, %v182
    %v184 = vpop.f32.mrf.mxu0
    %v185 = vadd.f32 %v91, %v184
    %186 = vmatprep.mubr.bf16.mxu0 0
    %187 = vmatmul.mubr.bf16.gmra.mxu0 %v110
    %v188 = vpop.f32.mrf.mxu0
    %v189 = vadd.f32 %v87, %v188
    %v190 = vpop.f32.mrf.mxu0
    %v191 = vadd.f32 %v91, %v190
    %v192 = vpop.f32.mrf.mxu0
    %v193 = vadd.f32 %v87, %v192
    %v194 = vpop.f32.mrf.mxu0
    %v195 = vadd.f32 %v91, %v194
    %196 = vmatprep.mubr.bf16.mxu0 0
    %197 = vmatmul.mubr.bf16.gmra.mxu0 %v113
    %v198 = vpop.f32.mrf.mxu0
    %v199 = vadd.f32 %v87, %v198
    %v200 = vpop.f32.mrf.mxu0
    %v201 = vadd.f32 %v91, %v200
    %v202 = vpop.f32.mrf.mxu0
    %v203 = vadd.f32 %v87, %v202
    %v204 = vpop.f32.mrf.mxu0
    %v205 = vadd.f32 %v91, %v204
    %206 = vmatprep.mubr.bf16.mxu0 0
    %207 = vmatmul.mubr.bf16.gmra.mxu0 %v116
    %v208 = vpop.f32.mrf.mxu0
    %v209 = vadd.f32 %v87, %v208
    %v210 = vpop.f32.mrf.mxu0
    %v211 = vadd.f32 %v91, %v210
    %v212 = vpop.f32.mrf.mxu0
    %v213 = vadd.f32 %v87, %v212
    %v214 = vpop.f32.mrf.mxu0
    %v215 = vadd.f32 %v91, %v214
    %216 = vmatprep.mubr.bf16.mxu0 0
    %217 = vmatmul.mubr.bf16.gmra.mxu0 %v119
    %v218 = vpop.f32.mrf.mxu0
    %v219 = vadd.f32 %v87, %v218
    %v220 = vpop.f32.mrf.mxu0
    %v221 = vadd.f32 %v91, %v220
    %v222 = vpop.f32.mrf.mxu0
    %v223 = vadd.f32 %v87, %v222
    %v224 = vpop.f32.mrf.mxu0
    %v225 = vadd.f32 %v91, %v224
    %226 = vmatprep.mubr.bf16.mxu0 0
    %227 = vmatmul.mubr.bf16.gmra.mxu0 %v122
    %v228 = vpop.f32.mrf.mxu0
    %v229 = vadd.f32 %v87, %v228
    %v230 = vpop.f32.mrf.mxu0
    %v231 = vadd.f32 %v91, %v230
    %v232 = vpop.f32.mrf.mxu0
    %v233 = vadd.f32 %v87, %v232
    %v234 = vpop.f32.mrf.mxu0
    %v235 = vadd.f32 %v91, %v234
    %236 = vmatprep.mubr.bf16.mxu0 0
    %237 = vmatmul.mubr.bf16.gmra.mxu0 %v125
    %v238 = vpop.f32.mrf.mxu0
    %v239 = vadd.f32 %v87, %v238
    %v240 = vpop.f32.mrf.mxu0
    %v241 = vadd.f32 %v91, %v240
    %v242 = vpop.f32.mrf.mxu0
    %v243 = vadd.f32 %v87, %v242
    %v244 = vpop.f32.mrf.mxu0
    %v245 = vadd.f32 %v91, %v244
    %246 = vdwg.mxu0
    %v247 = vpack.c.bf16 %v173, %v169
    %v248 = vpack.c.bf16 %v175, %v171
    %v249 = vpack.c.bf16 %v183, %v179
    %v250 = vpack.c.bf16 %v185, %v181
    %v251 = vpack.c.bf16 %v193, %v189
    %v252 = vpack.c.bf16 %v195, %v191
    %v253 = vpack.c.bf16 %v203, %v199
    %v254 = vpack.c.bf16 %v205, %v201
    %v255 = vpack.c.bf16 %v213, %v209
    %v256 = vpack.c.bf16 %v215, %v211
    %v257 = vpack.c.bf16 %v223, %v219
    %v258 = vpack.c.bf16 %v225, %v221
    %v259 = vpack.c.bf16 %v233, %v229
    %v260 = vpack.c.bf16 %v235, %v231
    %v261 = vpack.c.bf16 %v243, %v239
    %v262 = vpack.c.bf16 %v245, %v241
    %v279 = vunpack.c.l.b16 %v247
    %v280 = vunpack.c.l.b16 %v248
    %v281 = vunpack.c.h.b16 %v247
    %v282 = vunpack.c.h.b16 %v248
    %v283 = vunpack.c.l.b16 %v249
    %v284 = vunpack.c.l.b16 %v250
    %v285 = vunpack.c.h.b16 %v249
    %v286 = vunpack.c.h.b16 %v250
    %v287 = vunpack.c.l.b16 %v251
    %v288 = vunpack.c.l.b16 %v252
    %v289 = vunpack.c.h.b16 %v251
    %v290 = vunpack.c.h.b16 %v252
    %v291 = vunpack.c.l.b16 %v253
    %v292 = vunpack.c.l.b16 %v254
    %v293 = vunpack.c.h.b16 %v253
    %v294 = vunpack.c.h.b16 %v254
    %v295 = vunpack.c.l.b16 %v255
    %v296 = vunpack.c.l.b16 %v256
    %v297 = vunpack.c.h.b16 %v255
    %v298 = vunpack.c.h.b16 %v256
    %v299 = vunpack.c.l.b16 %v257
    %v300 = vunpack.c.l.b16 %v258
    %v301 = vunpack.c.h.b16 %v257
    %v302 = vunpack.c.h.b16 %v258
    %v303 = vunpack.c.l.b16 %v259
    %v304 = vunpack.c.l.b16 %v260
    %v305 = vunpack.c.h.b16 %v259
    %v306 = vunpack.c.h.b16 %v260
    %v307 = vunpack.c.l.b16 %v261
    %v308 = vunpack.c.l.b16 %v262
    %v309 = vunpack.c.h.b16 %v261
    %v310 = vunpack.c.h.b16 %v262
    %v311 = vpack.c.b16 %v280, %v279
    %v312 = vpack.c.b16 %v282, %v281
    %v313 = vpack.c.b16 %v284, %v283
    %v314 = vpack.c.b16 %v286, %v285
    %v315 = vpack.c.b16 %v288, %v287
    %v316 = vpack.c.b16 %v290, %v289
    %v317 = vpack.c.b16 %v292, %v291
    %v318 = vpack.c.b16 %v294, %v293
    %v319 = vpack.c.b16 %v296, %v295
    %v320 = vpack.c.b16 %v298, %v297
    %v321 = vpack.c.b16 %v300, %v299
    %v322 = vpack.c.b16 %v302, %v301
    %v323 = vpack.c.b16 %v304, %v303
    %v324 = vpack.c.b16 %v306, %v305
    %v325 = vpack.c.b16 %v308, %v307
    %v326 = vpack.c.b16 %v310, %v309
    %343 = vst [vmem:[#allocation2] sm:$0xff] %v311
    %344 = vst [vmem:[#allocation2 + $0x8] sm:$0xff] %v312
    %345 = vst [vmem:[#allocation2 + $0x10] sm:$0xff] %v313
    %346 = vst [vmem:[#allocation2 + $0x18] sm:$0xff] %v314
    %347 = vst [vmem:[#allocation2 + $0x20] sm:$0xff] %v315
    %348 = vst [vmem:[#allocation2 + $0x28] sm:$0xff] %v316
    %349 = vst [vmem:[#allocation2 + $0x30] sm:$0xff] %v317
    %350 = vst [vmem:[#allocation2 + $0x38] sm:$0xff] %v318
    %351 = vst [vmem:[#allocation2 + $0x40] sm:$0xff] %v319
    %352 = vst [vmem:[#allocation2 + $0x48] sm:$0xff] %v320
    %353 = vst [vmem:[#allocation2 + $0x50] sm:$0xff] %v321
    %354 = vst [vmem:[#allocation2 + $0x58] sm:$0xff] %v322
    %355 = vst [vmem:[#allocation2 + $0x60] sm:$0xff] %v323
    %356 = vst [vmem:[#allocation2 + $0x68] sm:$0xff] %v324
    %357 = vst [vmem:[#allocation2 + $0x70] sm:$0xff] %v325
    %358 = vst [vmem:[#allocation2 + $0x78] sm:$0xff] %v326
    %v359 = vlaneseq
    %v360 = vand.u32 %v359, 127
    %v361 = vadd.s32 %v360, 128
    %vm362 = vcmp.ge.s32.totalorder %v360, 128
    %vm363 = vcmp.ge.s32.totalorder %v361, 128
    %v364 = vsel %vm362, 1, 0
    %v365 = vsel %vm363, 1, 0
    %v366 = vmul.u32 %v364, 7
    %v367 = vmul.u32 %v365, 7
    %v368 = vmul.u32 %v364, 2
    %v369 = vmul.u32 %v365, 2
    %v370 = vsub.s32 1, %v368
    %v371 = vsub.s32 1, %v369
    %v372 = vld [vmem:[%s1] sm:$0xff]
    %v373 = vld [vmem:[%s1 + $0x8] sm:$0xff]
    %374 = vset.pattern.permute.xlu0 0
    %375 = vperm.xlu0 %374, %v372
    %v376 = vpop.permute.xlu0 %375
    %377 = vset.pattern.permute.xlu0 0
    %378 = vperm.xlu0 %377, %v373
    %v379 = vpop.permute.xlu0 %378
    %v380 = vld [vmem:[#allocation3] sm:$0xff]
    %v381 = vld [vmem:[#allocation3 + $0x8] sm:$0xff]
    %v382 = vld [vmem:[#allocation3 + $0x10] sm:$0xff]
    %v383 = vld [vmem:[#allocation3 + $0x18] sm:$0xff]
    %v384 = vld [vmem:[#allocation3 + $0x20] sm:$0xff]
    %v385 = vld [vmem:[#allocation3 + $0x28] sm:$0xff]
    %v386 = vld [vmem:[#allocation3 + $0x30] sm:$0xff]
    %v387 = vld [vmem:[#allocation3 + $0x38] sm:$0xff]
    %v388 = vld [vmem:[#allocation3 + $0x40] sm:$0xff]
    %v389 = vld [vmem:[#allocation3 + $0x48] sm:$0xff]
    %v390 = vld [vmem:[#allocation3 + $0x50] sm:$0xff]
    %v391 = vld [vmem:[#allocation3 + $0x58] sm:$0xff]
    %v392 = vld [vmem:[#allocation3 + $0x60] sm:$0xff]
    %v393 = vld [vmem:[#allocation3 + $0x68] sm:$0xff]
    %v394 = vld [vmem:[#allocation3 + $0x70] sm:$0xff]
    %v395 = vld [vmem:[#allocation3 + $0x78] sm:$0xff]
    %v396 = vld [vmem:[#allocation3 + $0x80] sm:$0xff]
    %v397 = vld [vmem:[#allocation3 + $0x88] sm:$0xff]
    %v398 = vld [vmem:[#allocation3 + $0x90] sm:$0xff]
    %v399 = vld [vmem:[#allocation3 + $0x98] sm:$0xff]
    %v400 = vld [vmem:[#allocation3 + $0xa0] sm:$0xff]
    %v401 = vld [vmem:[#allocation3 + $0xa8] sm:$0xff]
    %v402 = vld [vmem:[#allocation3 + $0xb0] sm:$0xff]
    %v403 = vld [vmem:[#allocation3 + $0xb8] sm:$0xff]
    %v404 = vld [vmem:[#allocation3 + $0xc0] sm:$0xff]
    %v405 = vld [vmem:[#allocation3 + $0xc8] sm:$0xff]
    %v406 = vld [vmem:[#allocation3 + $0xd0] sm:$0xff]
    %v407 = vld [vmem:[#allocation3 + $0xd8] sm:$0xff]
    %v408 = vld [vmem:[#allocation3 + $0xe0] sm:$0xff]
    %v409 = vld [vmem:[#allocation3 + $0xe8] sm:$0xff]
    %v410 = vld [vmem:[#allocation3 + $0xf0] sm:$0xff]
    %v411 = vld [vmem:[#allocation3 + $0xf8] sm:$0xff]
    %v412 = vld [vmem:[#allocation2] sm:$0xff]
    %v413 = vld [vmem:[#allocation2 + $0x8] sm:$0xff]
    %s414 = scalar_lea.vmem [#allocation2], 112
    %v415 = vld [vmem:[%s414] sm:$0xff]
    %v416 = vld [vmem:[%s414 + $0x8] sm:$0xff]
    %v419 = vunpack.c.l.b16 %v412
    %v420 = vunpack.c.l.b16 %v413
    %v421 = vpack.c.b16 %v420, %v419
    %v425 = vunpack.c.h.b16 %v415
    %v426 = vunpack.c.h.b16 %v416
    %v427 = vpack.c.b16 %v426, %v425
    %vm429 = vcmp.gt.s32.totalorder %v376, %v366
    %vm430 = vcmp.gt.s32.totalorder %v376, %v367
    %vm431 = vcmp.gt.s32.totalorder %v379, %v366
    %vm432 = vcmp.gt.s32.totalorder %v379, %v367
    %v433 = vunpack.c.l.bf16 %v421
    %v434 = vunpack.c.l.bf16 %v427
    %v435 = vunpack.c.h.bf16 %v421
    %v436 = vunpack.c.h.bf16 %v427
    %v437 = vtanh.pop %v433
    %v438 = vtanh.pop %v434
    %v439 = vtanh.pop %v435
    %v440 = vtanh.pop %v436
    %v441 = vsel %vm429, %v437, 0.0
    %v442 = vsel %vm430, %v438, 0.0
    %v443 = vsel %vm431, %v439, 0.0
    %v444 = vsel %vm432, %v440, 0.0
    %s445 = scalar_lea.vmem [#allocation2], 16
    %v446 = vld [vmem:[%s445] sm:$0xff]
    %v447 = vld [vmem:[%s445 + $0x8] sm:$0xff]
    %s448 = scalar_lea.vmem [#allocation2], 96
    %v449 = vld [vmem:[%s448] sm:$0xff]
    %v450 = vld [vmem:[%s448 + $0x8] sm:$0xff]
    %v453 = vunpack.c.l.b16 %v446
    %v454 = vunpack.c.l.b16 %v447
    %v455 = vpack.c.b16 %v454, %v453
    %v459 = vunpack.c.h.b16 %v449
    %v460 = vunpack.c.h.b16 %v450
    %v461 = vpack.c.b16 %v460, %v459
    %v463 = vpack.c.bf16 %v443, %v441
    %v464 = vpack.c.bf16 %v444, %v442
    %v497 = vunpack.c.l.b16 %v380
    %v498 = vunpack.c.h.b16 %v380
    %v499 = vunpack.c.l.b16 %v381
    %v500 = vunpack.c.h.b16 %v381
    %v501 = vunpack.c.l.b16 %v382
    %v502 = vunpack.c.h.b16 %v382
    %v503 = vunpack.c.l.b16 %v383
    %v504 = vunpack.c.h.b16 %v383
    %v505 = vunpack.c.l.b16 %v384
    %v506 = vunpack.c.h.b16 %v384
    %v507 = vunpack.c.l.b16 %v385
    %v508 = vunpack.c.h.b16 %v385
    %v509 = vunpack.c.l.b16 %v386
    %v510 = vunpack.c.h.b16 %v386
    %v511 = vunpack.c.l.b16 %v387
    %v512 = vunpack.c.h.b16 %v387
    %v513 = vunpack.c.l.b16 %v388
    %v514 = vunpack.c.h.b16 %v388
    %v515 = vunpack.c.l.b16 %v389
    %v516 = vunpack.c.h.b16 %v389
    %v517 = vunpack.c.l.b16 %v390
    %v518 = vunpack.c.h.b16 %v390
    %v519 = vunpack.c.l.b16 %v391
    %v520 = vunpack.c.h.b16 %v391
    %v521 = vunpack.c.l.b16 %v392
    %v522 = vunpack.c.h.b16 %v392
    %v523 = vunpack.c.l.b16 %v393
    %v524 = vunpack.c.h.b16 %v393
    %v525 = vunpack.c.l.b16 %v394
    %v526 = vunpack.c.h.b16 %v394
    %v527 = vunpack.c.l.b16 %v395
    %v528 = vunpack.c.h.b16 %v395
    %v529 = vunpack.c.l.b16 %v396
    %v530 = vunpack.c.h.b16 %v396
    %v531 = vunpack.c.l.b16 %v397
    %v532 = vunpack.c.h.b16 %v397
    %v533 = vunpack.c.l.b16 %v398
    %v534 = vunpack.c.h.b16 %v398
    %v535 = vunpack.c.l.b16 %v399
    %v536 = vunpack.c.h.b16 %v399
    %v537 = vunpack.c.l.b16 %v400
    %v538 = vunpack.c.h.b16 %v400
    %v539 = vunpack.c.l.b16 %v401
    %v540 = vunpack.c.h.b16 %v401
    %v541 = vunpack.c.l.b16 %v402
    %v542 = vunpack.c.h.b16 %v402
    %v543 = vunpack.c.l.b16 %v403
    %v544 = vunpack.c.h.b16 %v403
    %v545 = vunpack.c.l.b16 %v404
    %v546 = vunpack.c.h.b16 %v404
    %v547 = vunpack.c.l.b16 %v405
    %v548 = vunpack.c.h.b16 %v405
    %v549 = vunpack.c.l.b16 %v406
    %v550 = vunpack.c.h.b16 %v406
    %v551 = vunpack.c.l.b16 %v407
    %v552 = vunpack.c.h.b16 %v407
    %v553 = vunpack.c.l.b16 %v408
    %v554 = vunpack.c.h.b16 %v408
    %v555 = vunpack.c.l.b16 %v409
    %v556 = vunpack.c.h.b16 %v409
    %v557 = vunpack.c.l.b16 %v410
    %v558 = vunpack.c.h.b16 %v410
    %v559 = vunpack.c.l.b16 %v411
    %v560 = vunpack.c.h.b16 %v411
    %v561 = vpack.c.b16 %v499, %v497
    %v562 = vpack.c.b16 %v500, %v498
    %v563 = vpack.c.b16 %v503, %v501
    %v564 = vpack.c.b16 %v504, %v502
    %v565 = vpack.c.b16 %v507, %v505
    %v566 = vpack.c.b16 %v508, %v506
    %v567 = vpack.c.b16 %v511, %v509
    %v568 = vpack.c.b16 %v512, %v510
    %v569 = vpack.c.b16 %v515, %v513
    %v570 = vpack.c.b16 %v516, %v514
    %v571 = vpack.c.b16 %v519, %v517
    %v572 = vpack.c.b16 %v520, %v518
    %v573 = vpack.c.b16 %v523, %v521
    %v574 = vpack.c.b16 %v524, %v522
    %v575 = vpack.c.b16 %v527, %v525
    %v576 = vpack.c.b16 %v528, %v526
    %v577 = vpack.c.b16 %v531, %v529
    %v578 = vpack.c.b16 %v532, %v530
    %v579 = vpack.c.b16 %v535, %v533
    %v580 = vpack.c.b16 %v536, %v534
    %v581 = vpack.c.b16 %v539, %v537
    %v582 = vpack.c.b16 %v540, %v538
    %v583 = vpack.c.b16 %v543, %v541
    %v584 = vpack.c.b16 %v544, %v542
    %v585 = vpack.c.b16 %v547, %v545
    %v586 = vpack.c.b16 %v548, %v546
    %v587 = vpack.c.b16 %v551, %v549
    %v588 = vpack.c.b16 %v552, %v550
    %v589 = vpack.c.b16 %v555, %v553
    %v590 = vpack.c.b16 %v556, %v554
    %v591 = vpack.c.b16 %v559, %v557
    %v592 = vpack.c.b16 %v560, %v558
    %625 = vmatprep.subr.bf16.mxu0 %v576
    %626 = vmatpush1.bf16.msra.mxu0 %v575
    %627 = vmatprep.subr.bf16.mxu0 %v574
    %628 = vmatpush1.bf16.msra.mxu0 %v573
    %629 = vmatprep.subr.bf16.mxu0 %v572
    %630 = vmatpush1.bf16.msra.mxu0 %v571
    %631 = vmatprep.subr.bf16.mxu0 %v570
    %632 = vmatpush1.bf16.msra.mxu0 %v569
    %633 = vmatprep.subr.bf16.mxu0 %v568
    %634 = vmatpush1.bf16.msra.mxu0 %v567
    %635 = vmatprep.subr.bf16.mxu0 %v566
    %636 = vmatpush1.bf16.msra.mxu0 %v565
    %637 = vmatprep.subr.bf16.mxu0 %v564
    %638 = vmatpush1.bf16.msra.mxu0 %v563
    %639 = vmatprep.subr.bf16.mxu0 %v562
    %640 = vmatpush1.bf16.msra.mxu0 %v561
    %641 = vmatprep.subr.bf16.mxu0 %v592
    %642 = vmatpush2.bf16.msra.mxu0 %v591
    %643 = vmatprep.subr.bf16.mxu0 %v590
    %644 = vmatpush2.bf16.msra.mxu0 %v589
    %645 = vmatprep.subr.bf16.mxu0 %v588
    %646 = vmatpush2.bf16.msra.mxu0 %v587
    %647 = vmatprep.subr.bf16.mxu0 %v586
    %648 = vmatpush2.bf16.msra.mxu0 %v585
    %649 = vmatprep.subr.bf16.mxu0 %v584
    %650 = vmatpush2.bf16.msra.mxu0 %v583
    %651 = vmatprep.subr.bf16.mxu0 %v582
    %652 = vmatpush2.bf16.msra.mxu0 %v581
    %653 = vmatprep.subr.bf16.mxu0 %v580
    %654 = vmatpush2.bf16.msra.mxu0 %v579
    %655 = vmatprep.subr.bf16.mxu0 %v578
    %656 = vmatpush2.bf16.msra.mxu0 %v577
    %657 = vmatprep.mubr.bf16.mxu0 %v464
    %658 = vmatmul.mubr.bf16.gmra.mxu0 %v463
    %v659 = vpop.f32.mrf.mxu0
    %v660 = vadd.f32 0.0, %v659
    %v661 = vpop.f32.mrf.mxu0
    %v662 = vadd.f32 0.0, %v661
    %v663 = vpop.f32.mrf.mxu0
    %v664 = vadd.f32 0.0, %v663
    %v665 = vpop.f32.mrf.mxu0
    %v666 = vadd.f32 0.0, %v665
    %667 = vdwg.mxu0
    %v668 = vunpack.c.l.bf16 %v455
    %v669 = vunpack.c.l.bf16 %v461
    %v670 = vunpack.c.h.bf16 %v455
    %v671 = vunpack.c.h.bf16 %v461
    %v672 = vadd.f32 %v668, %v660
    %v673 = vadd.f32 %v669, %v662
    %v674 = vadd.f32 %v670, %v664
    %v675 = vadd.f32 %v671, %v666
    %v676 = vtanh.pop %v672
    %v677 = vtanh.pop %v673
    %v678 = vtanh.pop %v674
    %v679 = vtanh.pop %v675
    %v680 = vadd.s32 %v366, %v370
    %v681 = vadd.s32 %v367, %v371
    %vm682 = vcmp.gt.s32.totalorder %v376, %v680
    %vm683 = vcmp.gt.s32.totalorder %v376, %v681
    %vm684 = vcmp.gt.s32.totalorder %v379, %v680
    %vm685 = vcmp.gt.s32.totalorder %v379, %v681
    %v686 = vsel %vm682, %v676, %v441
    %v687 = vsel %vm683, %v677, %v442
    %v688 = vsel %vm684, %v678, %v443
    %v689 = vsel %vm685, %v679, %v444
    %s690 = scalar_lea.vmem [#allocation2], 32
    %v691 = vld [vmem:[%s690] sm:$0xff]
    %v692 = vld [vmem:[%s690 + $0x8] sm:$0xff]
    %s693 = scalar_lea.vmem [#allocation2], 80
    %v694 = vld [vmem:[%s693] sm:$0xff]
    %v695 = vld [vmem:[%s693 + $0x8] sm:$0xff]
    %v698 = vunpack.c.l.b16 %v691
    %v699 = vunpack.c.l.b16 %v692
    %v700 = vpack.c.b16 %v699, %v698
    %v704 = vunpack.c.h.b16 %v694
    %v705 = vunpack.c.h.b16 %v695
    %v706 = vpack.c.b16 %v705, %v704
    %v708 = vpack.c.bf16 %v688, %v686
    %v709 = vpack.c.bf16 %v689, %v687
    %710 = vmatprep.subr.bf16.mxu0 %v576
    %711 = vmatpush1.bf16.msra.mxu0 %v575
    %712 = vmatprep.subr.bf16.mxu0 %v574
    %713 = vmatpush1.bf16.msra.mxu0 %v573
    %714 = vmatprep.subr.bf16.mxu0 %v572
    %715 = vmatpush1.bf16.msra.mxu0 %v571
    %716 = vmatprep.subr.bf16.mxu0 %v570
    %717 = vmatpush1.bf16.msra.mxu0 %v569
    %718 = vmatprep.subr.bf16.mxu0 %v568
    %719 = vmatpush1.bf16.msra.mxu0 %v567
    %720 = vmatprep.subr.bf16.mxu0 %v566
    %721 = vmatpush1.bf16.msra.mxu0 %v565
    %722 = vmatprep.subr.bf16.mxu0 %v564
    %723 = vmatpush1.bf16.msra.mxu0 %v563
    %724 = vmatprep.subr.bf16.mxu0 %v562
    %725 = vmatpush1.bf16.msra.mxu0 %v561
    %726 = vmatprep.subr.bf16.mxu0 %v592
    %727 = vmatpush2.bf16.msra.mxu0 %v591
    %728 = vmatprep.subr.bf16.mxu0 %v590
    %729 = vmatpush2.bf16.msra.mxu0 %v589
    %730 = vmatprep.subr.bf16.mxu0 %v588
    %731 = vmatpush2.bf16.msra.mxu0 %v587
    %732 = vmatprep.subr.bf16.mxu0 %v586
    %733 = vmatpush2.bf16.msra.mxu0 %v585
    %734 = vmatprep.subr.bf16.mxu0 %v584
    %735 = vmatpush2.bf16.msra.mxu0 %v583
    %736 = vmatprep.subr.bf16.mxu0 %v582
    %737 = vmatpush2.bf16.msra.mxu0 %v581
    %738 = vmatprep.subr.bf16.mxu0 %v580
    %739 = vmatpush2.bf16.msra.mxu0 %v579
    %740 = vmatprep.subr.bf16.mxu0 %v578
    %741 = vmatpush2.bf16.msra.mxu0 %v577
    %742 = vmatprep.mubr.bf16.mxu0 %v709
    %743 = vmatmul.mubr.bf16.gmra.mxu0 %v708
    %v744 = vpop.f32.mrf.mxu0
    %v745 = vadd.f32 0.0, %v744
    %v746 = vpop.f32.mrf.mxu0
    %v747 = vadd.f32 0.0, %v746
    %v748 = vpop.f32.mrf.mxu0
    %v749 = vadd.f32 0.0, %v748
    %v750 = vpop.f32.mrf.mxu0
    %v751 = vadd.f32 0.0, %v750
    %752 = vdwg.mxu0
    %v753 = vunpack.c.l.bf16 %v700
    %v754 = vunpack.c.l.bf16 %v706
    %v755 = vunpack.c.h.bf16 %v700
    %v756 = vunpack.c.h.bf16 %v706
    %v757 = vadd.f32 %v753, %v745
    %v758 = vadd.f32 %v754, %v747
    %v759 = vadd.f32 %v755, %v749
    %v760 = vadd.f32 %v756, %v751
    %v761 = vtanh.pop %v757
    %v762 = vtanh.pop %v758
    %v763 = vtanh.pop %v759
    %v764 = vtanh.pop %v760
    %v765 = vmul.u32 %v370, 2
    %v766 = vmul.u32 %v371, 2
    %v767 = vadd.s32 %v366, %v765
    %v768 = vadd.s32 %v367, %v766
    %vm769 = vcmp.gt.s32.totalorder %v376, %v767
    %vm770 = vcmp.gt.s32.totalorder %v376, %v768
    %vm771 = vcmp.gt.s32.totalorder %v379, %v767
    %vm772 = vcmp.gt.s32.totalorder %v379, %v768
    %v773 = vsel %vm769, %v761, %v686
    %v774 = vsel %vm770, %v762, %v687
    %v775 = vsel %vm771, %v763, %v688
    %v776 = vsel %vm772, %v764, %v689
    %s777 = scalar_lea.vmem [#allocation2], 48
    %v778 = vld [vmem:[%s777] sm:$0xff]
    %v779 = vld [vmem:[%s777 + $0x8] sm:$0xff]
    %s780 = scalar_lea.vmem [#allocation2], 64
    %v781 = vld [vmem:[%s780] sm:$0xff]
    %v782 = vld [vmem:[%s780 + $0x8] sm:$0xff]
    %v785 = vunpack.c.l.b16 %v778
    %v786 = vunpack.c.l.b16 %v779
    %v787 = vpack.c.b16 %v786, %v785
    %v791 = vunpack.c.h.b16 %v781
    %v792 = vunpack.c.h.b16 %v782
    %v793 = vpack.c.b16 %v792, %v791
    %v795 = vpack.c.bf16 %v775, %v773
    %v796 = vpack.c.bf16 %v776, %v774
    %797 = vmatprep.subr.bf16.mxu0 %v576
    %798 = vmatpush1.bf16.msra.mxu0 %v575
    %799 = vmatprep.subr.bf16.mxu0 %v574
    %800 = vmatpush1.bf16.msra.mxu0 %v573
    %801 = vmatprep.subr.bf16.mxu0 %v572
    %802 = vmatpush1.bf16.msra.mxu0 %v571
    %803 = vmatprep.subr.bf16.mxu0 %v570
    %804 = vmatpush1.bf16.msra.mxu0 %v569
    %805 = vmatprep.subr.bf16.mxu0 %v568
    %806 = vmatpush1.bf16.msra.mxu0 %v567
    %807 = vmatprep.subr.bf16.mxu0 %v566
    %808 = vmatpush1.bf16.msra.mxu0 %v565
    %809 = vmatprep.subr.bf16.mxu0 %v564
    %810 = vmatpush1.bf16.msra.mxu0 %v563
    %811 = vmatprep.subr.bf16.mxu0 %v562
    %812 = vmatpush1.bf16.msra.mxu0 %v561
    %813 = vmatprep.subr.bf16.mxu0 %v592
    %814 = vmatpush2.bf16.msra.mxu0 %v591
    %815 = vmatprep.subr.bf16.mxu0 %v590
    %816 = vmatpush2.bf16.msra.mxu0 %v589
    %817 = vmatprep.subr.bf16.mxu0 %v588
    %818 = vmatpush2.bf16.msra.mxu0 %v587
    %819 = vmatprep.subr.bf16.mxu0 %v586
    %820 = vmatpush2.bf16.msra.mxu0 %v585
    %821 = vmatprep.subr.bf16.mxu0 %v584
    %822 = vmatpush2.bf16.msra.mxu0 %v583
    %823 = vmatprep.subr.bf16.mxu0 %v582
    %824 = vmatpush2.bf16.msra.mxu0 %v581
    %825 = vmatprep.subr.bf16.mxu0 %v580
    %826 = vmatpush2.bf16.msra.mxu0 %v579
    %827 = vmatprep.subr.bf16.mxu0 %v578
    %828 = vmatpush2.bf16.msra.mxu0 %v577
    %829 = vmatprep.mubr.bf16.mxu0 %v796
    %830 = vmatmul.mubr.bf16.gmra.mxu0 %v795
    %v831 = vpop.f32.mrf.mxu0
    %v832 = vadd.f32 0.0, %v831
    %v833 = vpop.f32.mrf.mxu0
    %v834 = vadd.f32 0.0, %v833
    %v835 = vpop.f32.mrf.mxu0
    %v836 = vadd.f32 0.0, %v835
    %v837 = vpop.f32.mrf.mxu0
    %v838 = vadd.f32 0.0, %v837
    %839 = vdwg.mxu0
    %v840 = vunpack.c.l.bf16 %v787
    %v841 = vunpack.c.l.bf16 %v793
    %v842 = vunpack.c.h.bf16 %v787
    %v843 = vunpack.c.h.bf16 %v793
    %v844 = vadd.f32 %v840, %v832
    %v845 = vadd.f32 %v841, %v834
    %v846 = vadd.f32 %v842, %v836
    %v847 = vadd.f32 %v843, %v838
    %v848 = vtanh.pop %v844
    %v849 = vtanh.pop %v845
    %v850 = vtanh.pop %v846
    %v851 = vtanh.pop %v847
    %v852 = vmul.u32 %v370, 3
    %v853 = vmul.u32 %v371, 3
    %v854 = vadd.s32 %v366, %v852
    %v855 = vadd.s32 %v367, %v853
    %vm856 = vcmp.gt.s32.totalorder %v376, %v854
    %vm857 = vcmp.gt.s32.totalorder %v376, %v855
    %vm858 = vcmp.gt.s32.totalorder %v379, %v854
    %vm859 = vcmp.gt.s32.totalorder %v379, %v855
    %v860 = vsel %vm856, %v848, %v773
    %v861 = vsel %vm857, %v849, %v774
    %v862 = vsel %vm858, %v850, %v775
    %v863 = vsel %vm859, %v851, %v776
    %v864 = vunpack.c.l.b16 %v781
    %v865 = vunpack.c.l.b16 %v782
    %v866 = vpack.c.b16 %v865, %v864
    %v868 = vunpack.c.h.b16 %v778
    %v869 = vunpack.c.h.b16 %v779
    %v870 = vpack.c.b16 %v869, %v868
    %v872 = vpack.c.bf16 %v862, %v860
    %v873 = vpack.c.bf16 %v863, %v861
    %874 = vmatprep.subr.bf16.mxu0 %v576
    %875 = vmatpush1.bf16.msra.mxu0 %v575
    %876 = vmatprep.subr.bf16.mxu0 %v574
    %877 = vmatpush1.bf16.msra.mxu0 %v573
    %878 = vmatprep.subr.bf16.mxu0 %v572
    %879 = vmatpush1.bf16.msra.mxu0 %v571
    %880 = vmatprep.subr.bf16.mxu0 %v570
    %881 = vmatpush1.bf16.msra.mxu0 %v569
    %882 = vmatprep.subr.bf16.mxu0 %v568
    %883 = vmatpush1.bf16.msra.mxu0 %v567
    %884 = vmatprep.subr.bf16.mxu0 %v566
    %885 = vmatpush1.bf16.msra.mxu0 %v565
    %886 = vmatprep.subr.bf16.mxu0 %v564
    %887 = vmatpush1.bf16.msra.mxu0 %v563
    %888 = vmatprep.subr.bf16.mxu0 %v562
    %889 = vmatpush1.bf16.msra.mxu0 %v561
    %890 = vmatprep.subr.bf16.mxu0 %v592
    %891 = vmatpush2.bf16.msra.mxu0 %v591
    %892 = vmatprep.subr.bf16.mxu0 %v590
    %893 = vmatpush2.bf16.msra.mxu0 %v589
    %894 = vmatprep.subr.bf16.mxu0 %v588
    %895 = vmatpush2.bf16.msra.mxu0 %v587
    %896 = vmatprep.subr.bf16.mxu0 %v586
    %897 = vmatpush2.bf16.msra.mxu0 %v585
    %898 = vmatprep.subr.bf16.mxu0 %v584
    %899 = vmatpush2.bf16.msra.mxu0 %v583
    %900 = vmatprep.subr.bf16.mxu0 %v582
    %901 = vmatpush2.bf16.msra.mxu0 %v581
    %902 = vmatprep.subr.bf16.mxu0 %v580
    %903 = vmatpush2.bf16.msra.mxu0 %v579
    %904 = vmatprep.subr.bf16.mxu0 %v578
    %905 = vmatpush2.bf16.msra.mxu0 %v577
    %906 = vmatprep.mubr.bf16.mxu0 %v873
    %907 = vmatmul.mubr.bf16.gmra.mxu0 %v872
    %v908 = vpop.f32.mrf.mxu0
    %v909 = vadd.f32 0.0, %v908
    %v910 = vpop.f32.mrf.mxu0
    %v911 = vadd.f32 0.0, %v910
    %v912 = vpop.f32.mrf.mxu0
    %v913 = vadd.f32 0.0, %v912
    %v914 = vpop.f32.mrf.mxu0
    %v915 = vadd.f32 0.0, %v914
    %916 = vdwg.mxu0
    %v917 = vunpack.c.l.bf16 %v866
    %v918 = vunpack.c.l.bf16 %v870
    %v919 = vunpack.c.h.bf16 %v866
    %v920 = vunpack.c.h.bf16 %v870
    %v921 = vadd.f32 %v917, %v909
    %v922 = vadd.f32 %v918, %v911
    %v923 = vadd.f32 %v919, %v913
    %v924 = vadd.f32 %v920, %v915
    %v925 = vtanh.pop %v921
    %v926 = vtanh.pop %v922
    %v927 = vtanh.pop %v923
    %v928 = vtanh.pop %v924
    %v929 = vmul.u32 %v370, 4
    %v930 = vmul.u32 %v371, 4
    %v931 = vadd.s32 %v366, %v929
    %v932 = vadd.s32 %v367, %v930
    %vm933 = vcmp.gt.s32.totalorder %v376, %v931
    %vm934 = vcmp.gt.s32.totalorder %v376, %v932
    %vm935 = vcmp.gt.s32.totalorder %v379, %v931
    %vm936 = vcmp.gt.s32.totalorder %v379, %v932
    %v937 = vsel %vm933, %v925, %v860
    %v938 = vsel %vm934, %v926, %v861
    %v939 = vsel %vm935, %v927, %v862
    %v940 = vsel %vm936, %v928, %v863
    %v941 = vunpack.c.l.b16 %v694
    %v942 = vunpack.c.l.b16 %v695
    %v943 = vpack.c.b16 %v942, %v941
    %v945 = vunpack.c.h.b16 %v691
    %v946 = vunpack.c.h.b16 %v692
    %v947 = vpack.c.b16 %v946, %v945
    %v949 = vpack.c.bf16 %v939, %v937
    %v950 = vpack.c.bf16 %v940, %v938
    %951 = vmatprep.subr.bf16.mxu0 %v576
    %952 = vmatpush1.bf16.msra.mxu0 %v575
    %953 = vmatprep.subr.bf16.mxu0 %v574
    %954 = vmatpush1.bf16.msra.mxu0 %v573
    %955 = vmatprep.subr.bf16.mxu0 %v572
    %956 = vmatpush1.bf16.msra.mxu0 %v571
    %957 = vmatprep.subr.bf16.mxu0 %v570
    %958 = vmatpush1.bf16.msra.mxu0 %v569
    %959 = vmatprep.subr.bf16.mxu0 %v568
    %960 = vmatpush1.bf16.msra.mxu0 %v567
    %961 = vmatprep.subr.bf16.mxu0 %v566
    %962 = vmatpush1.bf16.msra.mxu0 %v565
    %963 = vmatprep.subr.bf16.mxu0 %v564
    %964 = vmatpush1.bf16.msra.mxu0 %v563
    %965 = vmatprep.subr.bf16.mxu0 %v562
    %966 = vmatpush1.bf16.msra.mxu0 %v561
    %967 = vmatprep.subr.bf16.mxu0 %v592
    %968 = vmatpush2.bf16.msra.mxu0 %v591
    %969 = vmatprep.subr.bf16.mxu0 %v590
    %970 = vmatpush2.bf16.msra.mxu0 %v589
    %971 = vmatprep.subr.bf16.mxu0 %v588
    %972 = vmatpush2.bf16.msra.mxu0 %v587
    %973 = vmatprep.subr.bf16.mxu0 %v586
    %974 = vmatpush2.bf16.msra.mxu0 %v585
    %975 = vmatprep.subr.bf16.mxu0 %v584
    %976 = vmatpush2.bf16.msra.mxu0 %v583
    %977 = vmatprep.subr.bf16.mxu0 %v582
    %978 = vmatpush2.bf16.msra.mxu0 %v581
    %979 = vmatprep.subr.bf16.mxu0 %v580
    %980 = vmatpush2.bf16.msra.mxu0 %v579
    %981 = vmatprep.subr.bf16.mxu0 %v578
    %982 = vmatpush2.bf16.msra.mxu0 %v577
    %983 = vmatprep.mubr.bf16.mxu0 %v950
    %984 = vmatmul.mubr.bf16.gmra.mxu0 %v949
    %v985 = vpop.f32.mrf.mxu0
    %v986 = vadd.f32 0.0, %v985
    %v987 = vpop.f32.mrf.mxu0
    %v988 = vadd.f32 0.0, %v987
    %v989 = vpop.f32.mrf.mxu0
    %v990 = vadd.f32 0.0, %v989
    %v991 = vpop.f32.mrf.mxu0
    %v992 = vadd.f32 0.0, %v991
    %993 = vdwg.mxu0
    %v994 = vunpack.c.l.bf16 %v943
    %v995 = vunpack.c.l.bf16 %v947
    %v996 = vunpack.c.h.bf16 %v943
    %v997 = vunpack.c.h.bf16 %v947
    %v998 = vadd.f32 %v994, %v986
    %v999 = vadd.f32 %v995, %v988
    %v1000 = vadd.f32 %v996, %v990
    %v1001 = vadd.f32 %v997, %v992
    %v1002 = vtanh.pop %v998
    %v1003 = vtanh.pop %v999
    %v1004 = vtanh.pop %v1000
    %v1005 = vtanh.pop %v1001
    %v1006 = vmul.u32 %v370, 5
    %v1007 = vmul.u32 %v371, 5
    %v1008 = vadd.s32 %v366, %v1006
    %v1009 = vadd.s32 %v367, %v1007
    %vm1010 = vcmp.gt.s32.totalorder %v376, %v1008
    %vm1011 = vcmp.gt.s32.totalorder %v376, %v1009
    %vm1012 = vcmp.gt.s32.totalorder %v379, %v1008
    %vm1013 = vcmp.gt.s32.totalorder %v379, %v1009
    %v1014 = vsel %vm1010, %v1002, %v937
    %v1015 = vsel %vm1011, %v1003, %v938
    %v1016 = vsel %vm1012, %v1004, %v939
    %v1017 = vsel %vm1013, %v1005, %v940
    %v1018 = vunpack.c.l.b16 %v449
    %v1019 = vunpack.c.l.b16 %v450
    %v1020 = vpack.c.b16 %v1019, %v1018
    %v1022 = vunpack.c.h.b16 %v446
    %v1023 = vunpack.c.h.b16 %v447
    %v1024 = vpack.c.b16 %v1023, %v1022
    %v1026 = vpack.c.bf16 %v1016, %v1014
    %v1027 = vpack.c.bf16 %v1017, %v1015
    %1028 = vmatprep.subr.bf16.mxu0 %v576
    %1029 = vmatpush1.bf16.msra.mxu0 %v575
    %1030 = vmatprep.subr.bf16.mxu0 %v574
    %1031 = vmatpush1.bf16.msra.mxu0 %v573
    %1032 = vmatprep.subr.bf16.mxu0 %v572
    %1033 = vmatpush1.bf16.msra.mxu0 %v571
    %1034 = vmatprep.subr.bf16.mxu0 %v570
    %1035 = vmatpush1.bf16.msra.mxu0 %v569
    %1036 = vmatprep.subr.bf16.mxu0 %v568
    %1037 = vmatpush1.bf16.msra.mxu0 %v567
    %1038 = vmatprep.subr.bf16.mxu0 %v566
    %1039 = vmatpush1.bf16.msra.mxu0 %v565
    %1040 = vmatprep.subr.bf16.mxu0 %v564
    %1041 = vmatpush1.bf16.msra.mxu0 %v563
    %1042 = vmatprep.subr.bf16.mxu0 %v562
    %1043 = vmatpush1.bf16.msra.mxu0 %v561
    %1044 = vmatprep.subr.bf16.mxu0 %v592
    %1045 = vmatpush2.bf16.msra.mxu0 %v591
    %1046 = vmatprep.subr.bf16.mxu0 %v590
    %1047 = vmatpush2.bf16.msra.mxu0 %v589
    %1048 = vmatprep.subr.bf16.mxu0 %v588
    %1049 = vmatpush2.bf16.msra.mxu0 %v587
    %1050 = vmatprep.subr.bf16.mxu0 %v586
    %1051 = vmatpush2.bf16.msra.mxu0 %v585
    %1052 = vmatprep.subr.bf16.mxu0 %v584
    %1053 = vmatpush2.bf16.msra.mxu0 %v583
    %1054 = vmatprep.subr.bf16.mxu0 %v582
    %1055 = vmatpush2.bf16.msra.mxu0 %v581
    %1056 = vmatprep.subr.bf16.mxu0 %v580
    %1057 = vmatpush2.bf16.msra.mxu0 %v579
    %1058 = vmatprep.subr.bf16.mxu0 %v578
    %1059 = vmatpush2.bf16.msra.mxu0 %v577
    %1060 = vmatprep.mubr.bf16.mxu0 %v1027
    %1061 = vmatmul.mubr.bf16.gmra.mxu0 %v1026
    %v1062 = vpop.f32.mrf.mxu0
    %v1063 = vadd.f32 0.0, %v1062
    %v1064 = vpop.f32.mrf.mxu0
    %v1065 = vadd.f32 0.0, %v1064
    %v1066 = vpop.f32.mrf.mxu0
    %v1067 = vadd.f32 0.0, %v1066
    %v1068 = vpop.f32.mrf.mxu0
    %v1069 = vadd.f32 0.0, %v1068
    %1070 = vdwg.mxu0
    %v1071 = vunpack.c.l.bf16 %v1020
    %v1072 = vunpack.c.l.bf16 %v1024
    %v1073 = vunpack.c.h.bf16 %v1020
    %v1074 = vunpack.c.h.bf16 %v1024
    %v1075 = vadd.f32 %v1071, %v1063
    %v1076 = vadd.f32 %v1072, %v1065
    %v1077 = vadd.f32 %v1073, %v1067
    %v1078 = vadd.f32 %v1074, %v1069
    %v1079 = vtanh.pop %v1075
    %v1080 = vtanh.pop %v1076
    %v1081 = vtanh.pop %v1077
    %v1082 = vtanh.pop %v1078
    %v1083 = vmul.u32 %v370, 6
    %v1084 = vmul.u32 %v371, 6
    %v1085 = vadd.s32 %v366, %v1083
    %v1086 = vadd.s32 %v367, %v1084
    %vm1087 = vcmp.gt.s32.totalorder %v376, %v1085
    %vm1088 = vcmp.gt.s32.totalorder %v376, %v1086
    %vm1089 = vcmp.gt.s32.totalorder %v379, %v1085
    %vm1090 = vcmp.gt.s32.totalorder %v379, %v1086
    %v1091 = vsel %vm1087, %v1079, %v1014
    %v1092 = vsel %vm1088, %v1080, %v1015
    %v1093 = vsel %vm1089, %v1081, %v1016
    %v1094 = vsel %vm1090, %v1082, %v1017
    %v1095 = vunpack.c.l.b16 %v415
    %v1096 = vunpack.c.l.b16 %v416
    %v1097 = vpack.c.b16 %v1096, %v1095
    %v1099 = vunpack.c.h.b16 %v412
    %v1100 = vunpack.c.h.b16 %v413
    %v1101 = vpack.c.b16 %v1100, %v1099
    %v1103 = vpack.c.bf16 %v1093, %v1091
    %v1104 = vpack.c.bf16 %v1094, %v1092
    %1105 = vmatprep.subr.bf16.mxu0 %v576
    %1106 = vmatpush1.bf16.msra.mxu0 %v575
    %1107 = vmatprep.subr.bf16.mxu0 %v574
    %1108 = vmatpush1.bf16.msra.mxu0 %v573
    %1109 = vmatprep.subr.bf16.mxu0 %v572
    %1110 = vmatpush1.bf16.msra.mxu0 %v571
    %1111 = vmatprep.subr.bf16.mxu0 %v570
    %1112 = vmatpush1.bf16.msra.mxu0 %v569
    %1113 = vmatprep.subr.bf16.mxu0 %v568
    %1114 = vmatpush1.bf16.msra.mxu0 %v567
    %1115 = vmatprep.subr.bf16.mxu0 %v566
    %1116 = vmatpush1.bf16.msra.mxu0 %v565
    %1117 = vmatprep.subr.bf16.mxu0 %v564
    %1118 = vmatpush1.bf16.msra.mxu0 %v563
    %1119 = vmatprep.subr.bf16.mxu0 %v562
    %1120 = vmatpush1.bf16.msra.mxu0 %v561
    %1121 = vmatprep.subr.bf16.mxu0 %v592
    %1122 = vmatpush2.bf16.msra.mxu0 %v591
    %1123 = vmatprep.subr.bf16.mxu0 %v590
    %1124 = vmatpush2.bf16.msra.mxu0 %v589
    %1125 = vmatprep.subr.bf16.mxu0 %v588
    %1126 = vmatpush2.bf16.msra.mxu0 %v587
    %1127 = vmatprep.subr.bf16.mxu0 %v586
    %1128 = vmatpush2.bf16.msra.mxu0 %v585
    %1129 = vmatprep.subr.bf16.mxu0 %v584
    %1130 = vmatpush2.bf16.msra.mxu0 %v583
    %1131 = vmatprep.subr.bf16.mxu0 %v582
    %1132 = vmatpush2.bf16.msra.mxu0 %v581
    %1133 = vmatprep.subr.bf16.mxu0 %v580
    %1134 = vmatpush2.bf16.msra.mxu0 %v579
    %1135 = vmatprep.subr.bf16.mxu0 %v578
    %1136 = vmatpush2.bf16.msra.mxu0 %v577
    %1137 = vmatprep.mubr.bf16.mxu0 %v1104
    %1138 = vmatmul.mubr.bf16.gmra.mxu0 %v1103
    %v1139 = vpop.f32.mrf.mxu0
    %v1140 = vadd.f32 0.0, %v1139
    %v1141 = vpop.f32.mrf.mxu0
    %v1142 = vadd.f32 0.0, %v1141
    %v1143 = vpop.f32.mrf.mxu0
    %v1144 = vadd.f32 0.0, %v1143
    %v1145 = vpop.f32.mrf.mxu0
    %v1146 = vadd.f32 0.0, %v1145
    %1147 = vdwg.mxu0
    %v1148 = vunpack.c.l.bf16 %v1097
    %v1149 = vunpack.c.l.bf16 %v1101
    %v1150 = vunpack.c.h.bf16 %v1097
    %v1151 = vunpack.c.h.bf16 %v1101
    %v1152 = vadd.f32 %v1148, %v1140
    %v1153 = vadd.f32 %v1149, %v1142
    %v1154 = vadd.f32 %v1150, %v1144
    %v1155 = vadd.f32 %v1151, %v1146
    %v1156 = vtanh.pop %v1152
    %v1157 = vtanh.pop %v1153
    %v1158 = vtanh.pop %v1154
    %v1159 = vtanh.pop %v1155
    %v1160 = vmul.u32 %v370, 7
    %v1161 = vmul.u32 %v371, 7
    %v1162 = vadd.s32 %v366, %v1160
    %v1163 = vadd.s32 %v367, %v1161
    %vm1164 = vcmp.gt.s32.totalorder %v376, %v1162
    %vm1165 = vcmp.gt.s32.totalorder %v376, %v1163
    %vm1166 = vcmp.gt.s32.totalorder %v379, %v1162
    %vm1167 = vcmp.gt.s32.totalorder %v379, %v1163
    %v1168 = vsel %vm1164, %v1156, 0.0
    %v1169 = vsel %vm1165, %v1157, 0.0
    %v1170 = vsel %vm1166, %v1158, 0.0
    %v1171 = vsel %vm1167, %v1159, 0.0
    %v1172 = vpack.c.bf16 %v1171, %v1169
    %v1173 = vpack.c.bf16 %v1170, %v1168
    %v1174 = vld [vmem:[#allocation6] sm:$0xf]
    %v1175 = vld [vmem:[#allocation6 + $0x4] sm:$0xf]
    %v1176 = vld [vmem:[#allocation6 + $0x8] sm:$0xf]
    %v1177 = vld [vmem:[#allocation6 + $0xc] sm:$0xf]
    %v1178 = vld [vmem:[#allocation6 + $0x10] sm:$0xf]
    %v1179 = vld [vmem:[#allocation6 + $0x14] sm:$0xf]
    %v1180 = vld [vmem:[#allocation6 + $0x18] sm:$0xf]
    %v1181 = vld [vmem:[#allocation6 + $0x1c] sm:$0xf]
    %v1182 = vld [vmem:[#allocation6 + $0x20] sm:$0xf]
    %v1183 = vld [vmem:[#allocation6 + $0x24] sm:$0xf]
    %v1184 = vld [vmem:[#allocation6 + $0x28] sm:$0xf]
    %v1185 = vld [vmem:[#allocation6 + $0x2c] sm:$0xf]
    %v1186 = vld [vmem:[#allocation6 + $0x30] sm:$0xf]
    %v1187 = vld [vmem:[#allocation6 + $0x34] sm:$0xf]
    %v1188 = vld [vmem:[#allocation6 + $0x38] sm:$0xf]
    %v1189 = vld [vmem:[#allocation6 + $0x3c] sm:$0xf]
    %v1190 = vld [vmem:[#allocation6 + $0x40] sm:$0xf]
    %v1191 = vld [vmem:[#allocation6 + $0x44] sm:$0xf]
    %v1192 = vld [vmem:[#allocation6 + $0x48] sm:$0xf]
    %v1193 = vld [vmem:[#allocation6 + $0x4c] sm:$0xf]
    %v1194 = vld [vmem:[#allocation6 + $0x50] sm:$0xf]
    %v1195 = vld [vmem:[#allocation6 + $0x54] sm:$0xf]
    %v1196 = vld [vmem:[#allocation6 + $0x58] sm:$0xf]
    %v1197 = vld [vmem:[#allocation6 + $0x5c] sm:$0xf]
    %v1198 = vld [vmem:[#allocation6 + $0x60] sm:$0xf]
    %v1199 = vld [vmem:[#allocation6 + $0x64] sm:$0xf]
    %v1200 = vld [vmem:[#allocation6 + $0x68] sm:$0xf]
    %v1201 = vld [vmem:[#allocation6 + $0x6c] sm:$0xf]
    %v1202 = vld [vmem:[#allocation6 + $0x70] sm:$0xf]
    %v1203 = vld [vmem:[#allocation6 + $0x74] sm:$0xf]
    %v1204 = vld [vmem:[#allocation6 + $0x78] sm:$0xf]
    %v1205 = vld [vmem:[#allocation6 + $0x7c] sm:$0xf]
    %v1206 = vld [vmem:[#allocation6 + $0x80] sm:$0xf]
    %v1207 = vld [vmem:[#allocation6 + $0x84] sm:$0xf]
    %v1208 = vld [vmem:[#allocation6 + $0x88] sm:$0xf]
    %v1209 = vld [vmem:[#allocation6 + $0x8c] sm:$0xf]
    %v1210 = vld [vmem:[#allocation6 + $0x90] sm:$0xf]
    %v1211 = vld [vmem:[#allocation6 + $0x94] sm:$0xf]
    %v1212 = vld [vmem:[#allocation6 + $0x98] sm:$0xf]
    %v1213 = vld [vmem:[#allocation6 + $0x9c] sm:$0xf]
    %v1214 = vld [vmem:[#allocation6 + $0xa0] sm:$0xf]
    %v1215 = vld [vmem:[#allocation6 + $0xa4] sm:$0xf]
    %v1216 = vld [vmem:[#allocation6 + $0xa8] sm:$0xf]
    %v1217 = vld [vmem:[#allocation6 + $0xac] sm:$0xf]
    %v1218 = vld [vmem:[#allocation6 + $0xb0] sm:$0xf]
    %v1219 = vld [vmem:[#allocation6 + $0xb4] sm:$0xf]
    %v1220 = vld [vmem:[#allocation6 + $0xb8] sm:$0xf]
    %v1221 = vld [vmem:[#allocation6 + $0xbc] sm:$0xf]
    %v1222 = vld [vmem:[#allocation6 + $0xc0] sm:$0xf]
    %v1223 = vld [vmem:[#allocation6 + $0xc4] sm:$0xf]
    %v1224 = vld [vmem:[#allocation6 + $0xc8] sm:$0xf]
    %v1225 = vld [vmem:[#allocation6 + $0xcc] sm:$0xf]
    %v1226 = vld [vmem:[#allocation6 + $0xd0] sm:$0xf]
    %v1227 = vld [vmem:[#allocation6 + $0xd4] sm:$0xf]
    %v1228 = vld [vmem:[#allocation6 + $0xd8] sm:$0xf]
    %v1229 = vld [vmem:[#allocation6 + $0xdc] sm:$0xf]
    %v1230 = vld [vmem:[#allocation6 + $0xe0] sm:$0xf]
    %v1231 = vld [vmem:[#allocation6 + $0xe4] sm:$0xf]
    %v1232 = vld [vmem:[#allocation6 + $0xe8] sm:$0xf]
    %v1233 = vld [vmem:[#allocation6 + $0xec] sm:$0xf]
    %v1234 = vld [vmem:[#allocation6 + $0xf0] sm:$0xf]
    %v1235 = vld [vmem:[#allocation6 + $0xf4] sm:$0xf]
    %v1236 = vld [vmem:[#allocation6 + $0xf8] sm:$0xf]
    %v1237 = vld [vmem:[#allocation6 + $0xfc] sm:$0xf]
    %v1238 = vld [vmem:[%s6] sm:$0x1]
    %v1240 = vlaneseq
    %v1241 = vshrl.u32 %v1240, 7
    %v1242 = vsub.s32 0, %v1241
    %v1243 = vrot.slane %v1238, %v1242
    %v1309 = vunpack.c.l.b16 %v1174
    %v1310 = vunpack.c.l.b16 %v1175
    %v1311 = vunpack.c.l.b16 %v1176
    %v1312 = vunpack.c.l.b16 %v1177
    %v1313 = vunpack.c.l.b16 %v1178
    %v1314 = vunpack.c.l.b16 %v1179
    %v1315 = vunpack.c.l.b16 %v1180
    %v1316 = vunpack.c.l.b16 %v1181
    %v1317 = vunpack.c.l.b16 %v1182
    %v1318 = vunpack.c.l.b16 %v1183
    %v1319 = vunpack.c.l.b16 %v1184
    %v1320 = vunpack.c.l.b16 %v1185
    %v1321 = vunpack.c.l.b16 %v1186
    %v1322 = vunpack.c.l.b16 %v1187
    %v1323 = vunpack.c.l.b16 %v1188
    %v1324 = vunpack.c.l.b16 %v1189
    %v1325 = vunpack.c.l.b16 %v1190
    %v1326 = vunpack.c.l.b16 %v1191
    %v1327 = vunpack.c.l.b16 %v1192
    %v1328 = vunpack.c.l.b16 %v1193
    %v1329 = vunpack.c.l.b16 %v1194
    %v1330 = vunpack.c.l.b16 %v1195
    %v1331 = vunpack.c.l.b16 %v1196
    %v1332 = vunpack.c.l.b16 %v1197
    %v1333 = vunpack.c.l.b16 %v1198
    %v1334 = vunpack.c.l.b16 %v1199
    %v1335 = vunpack.c.l.b16 %v1200
    %v1336 = vunpack.c.l.b16 %v1201
    %v1337 = vunpack.c.l.b16 %v1202
    %v1338 = vunpack.c.l.b16 %v1203
    %v1339 = vunpack.c.l.b16 %v1204
    %v1340 = vunpack.c.l.b16 %v1205
    %v1341 = vunpack.c.l.b16 %v1206
    %v1342 = vunpack.c.l.b16 %v1207
    %v1343 = vunpack.c.l.b16 %v1208
    %v1344 = vunpack.c.l.b16 %v1209
    %v1345 = vunpack.c.l.b16 %v1210
    %v1346 = vunpack.c.l.b16 %v1211
    %v1347 = vunpack.c.l.b16 %v1212
    %v1348 = vunpack.c.l.b16 %v1213
    %v1349 = vunpack.c.l.b16 %v1214
    %v1350 = vunpack.c.l.b16 %v1215
    %v1351 = vunpack.c.l.b16 %v1216
    %v1352 = vunpack.c.l.b16 %v1217
    %v1353 = vunpack.c.l.b16 %v1218
    %v1354 = vunpack.c.l.b16 %v1219
    %v1355 = vunpack.c.l.b16 %v1220
    %v1356 = vunpack.c.l.b16 %v1221
    %v1357 = vunpack.c.l.b16 %v1222
    %v1358 = vunpack.c.l.b16 %v1223
    %v1359 = vunpack.c.l.b16 %v1224
    %v1360 = vunpack.c.l.b16 %v1225
    %v1361 = vunpack.c.l.b16 %v1226
    %v1362 = vunpack.c.l.b16 %v1227
    %v1363 = vunpack.c.l.b16 %v1228
    %v1364 = vunpack.c.l.b16 %v1229
    %v1365 = vunpack.c.l.b16 %v1230
    %v1366 = vunpack.c.l.b16 %v1231
    %v1367 = vunpack.c.l.b16 %v1232
    %v1368 = vunpack.c.l.b16 %v1233
    %v1369 = vunpack.c.l.b16 %v1234
    %v1370 = vunpack.c.l.b16 %v1235
    %v1371 = vunpack.c.l.b16 %v1236
    %v1372 = vunpack.c.l.b16 %v1237
    %v1373 = vpack.c.b16 %v1310, %v1309
    %v1374 = vpack.c.b16 %v1312, %v1311
    %v1375 = vpack.c.b16 %v1314, %v1313
    %v1376 = vpack.c.b16 %v1316, %v1315
    %v1377 = vpack.c.b16 %v1318, %v1317
    %v1378 = vpack.c.b16 %v1320, %v1319
    %v1379 = vpack.c.b16 %v1322, %v1321
    %v1380 = vpack.c.b16 %v1324, %v1323
    %v1381 = vpack.c.b16 %v1326, %v1325
    %v1382 = vpack.c.b16 %v1328, %v1327
    %v1383 = vpack.c.b16 %v1330, %v1329
    %v1384 = vpack.c.b16 %v1332, %v1331
    %v1385 = vpack.c.b16 %v1334, %v1333
    %v1386 = vpack.c.b16 %v1336, %v1335
    %v1387 = vpack.c.b16 %v1338, %v1337
    %v1388 = vpack.c.b16 %v1340, %v1339
    %v1389 = vpack.c.b16 %v1342, %v1341
    %v1390 = vpack.c.b16 %v1344, %v1343
    %v1391 = vpack.c.b16 %v1346, %v1345
    %v1392 = vpack.c.b16 %v1348, %v1347
    %v1393 = vpack.c.b16 %v1350, %v1349
    %v1394 = vpack.c.b16 %v1352, %v1351
    %v1395 = vpack.c.b16 %v1354, %v1353
    %v1396 = vpack.c.b16 %v1356, %v1355
    %v1397 = vpack.c.b16 %v1358, %v1357
    %v1398 = vpack.c.b16 %v1360, %v1359
    %v1399 = vpack.c.b16 %v1362, %v1361
    %v1400 = vpack.c.b16 %v1364, %v1363
    %v1401 = vpack.c.b16 %v1366, %v1365
    %v1402 = vpack.c.b16 %v1368, %v1367
    %v1403 = vpack.c.b16 %v1370, %v1369
    %v1404 = vpack.c.b16 %v1372, %v1371
    %1437 = vmatprep.subr.bf16.mxu0 0
    %1438 = vmatpush1.bf16.msra.mxu0 %v1380
    %1439 = vmatprep.subr.bf16.mxu0 0
    %1440 = vmatpush1.bf16.msra.mxu0 %v1379
    %1441 = vmatprep.subr.bf16.mxu0 0
    %1442 = vmatpush1.bf16.msra.mxu0 %v1378
    %1443 = vmatprep.subr.bf16.mxu0 0
    %1444 = vmatpush1.bf16.msra.mxu0 %v1377
    %1445 = vmatprep.subr.bf16.mxu0 0
    %1446 = vmatpush1.bf16.msra.mxu0 %v1376
    %1447 = vmatprep.subr.bf16.mxu0 0
    %1448 = vmatpush1.bf16.msra.mxu0 %v1375
    %1449 = vmatprep.subr.bf16.mxu0 0
    %1450 = vmatpush1.bf16.msra.mxu0 %v1374
    %1451 = vmatprep.subr.bf16.mxu0 0
    %1452 = vmatpush1.bf16.msra.mxu0 %v1373
    %1453 = vmatprep.subr.bf16.mxu0 0
    %1454 = vmatpush2.bf16.msra.mxu0 %v1388
    %1455 = vmatprep.subr.bf16.mxu0 0
    %1456 = vmatpush2.bf16.msra.mxu0 %v1387
    %1457 = vmatprep.subr.bf16.mxu0 0
    %1458 = vmatpush2.bf16.msra.mxu0 %v1386
    %1459 = vmatprep.subr.bf16.mxu0 0
    %1460 = vmatpush2.bf16.msra.mxu0 %v1385
    %1461 = vmatprep.subr.bf16.mxu0 0
    %1462 = vmatpush2.bf16.msra.mxu0 %v1384
    %1463 = vmatprep.subr.bf16.mxu0 0
    %1464 = vmatpush2.bf16.msra.mxu0 %v1383
    %1465 = vmatprep.subr.bf16.mxu0 0
    %1466 = vmatpush2.bf16.msra.mxu0 %v1382
    %1467 = vmatprep.subr.bf16.mxu0 0
    %1468 = vmatpush2.bf16.msra.mxu0 %v1381
    %1469 = vmatprep.mubr.bf16.mxu0 %v1172
    %1470 = vmatmul.mubr.bf16.gmra.mxu0 %v463
    %v1471 = vpop.f32.mrf.mxu0
    %v1472 = vadd.f32 %v1243, %v1471
    %v1473 = vpop.f32.mrf.mxu0
    %v1474 = vpop.f32.mrf.mxu0
    %v1475 = vadd.f32 %v1243, %v1474
    %v1476 = vpop.f32.mrf.mxu0
    %1477 = vdwg.mxu0
    %1478 = vmatprep.subr.bf16.mxu0 0
    %1479 = vmatpush1.bf16.msra.mxu0 %v1396
    %1480 = vmatprep.subr.bf16.mxu0 0
    %1481 = vmatpush1.bf16.msra.mxu0 %v1395
    %1482 = vmatprep.subr.bf16.mxu0 0
    %1483 = vmatpush1.bf16.msra.mxu0 %v1394
    %1484 = vmatprep.subr.bf16.mxu0 0
    %1485 = vmatpush1.bf16.msra.mxu0 %v1393
    %1486 = vmatprep.subr.bf16.mxu0 0
    %1487 = vmatpush1.bf16.msra.mxu0 %v1392
    %1488 = vmatprep.subr.bf16.mxu0 0
    %1489 = vmatpush1.bf16.msra.mxu0 %v1391
    %1490 = vmatprep.subr.bf16.mxu0 0
    %1491 = vmatpush1.bf16.msra.mxu0 %v1390
    %1492 = vmatprep.subr.bf16.mxu0 0
    %1493 = vmatpush1.bf16.msra.mxu0 %v1389
    %1494 = vmatprep.subr.bf16.mxu0 0
    %1495 = vmatpush2.bf16.msra.mxu0 %v1404
    %1496 = vmatprep.subr.bf16.mxu0 0
    %1497 = vmatpush2.bf16.msra.mxu0 %v1403
    %1498 = vmatprep.subr.bf16.mxu0 0
    %1499 = vmatpush2.bf16.msra.mxu0 %v1402
    %1500 = vmatprep.subr.bf16.mxu0 0
    %1501 = vmatpush2.bf16.msra.mxu0 %v1401
    %1502 = vmatprep.subr.bf16.mxu0 0
    %1503 = vmatpush2.bf16.msra.mxu0 %v1400
    %1504 = vmatprep.subr.bf16.mxu0 0
    %1505 = vmatpush2.bf16.msra.mxu0 %v1399
    %1506 = vmatprep.subr.bf16.mxu0 0
    %1507 = vmatpush2.bf16.msra.mxu0 %v1398
    %1508 = vmatprep.subr.bf16.mxu0 0
    %1509 = vmatpush2.bf16.msra.mxu0 %v1397
    %1510 = vmatprep.mubr.bf16.mxu0 %v464
    %1511 = vmatmul.mubr.bf16.gmra.mxu0 %v1173
    %v1512 = vpop.f32.mrf.mxu0
    %v1513 = vadd.f32 %v1472, %v1512
    %v1514 = vpop.f32.mrf.mxu0
    %v1515 = vpop.f32.mrf.mxu0
    %v1516 = vadd.f32 %v1475, %v1515
    %v1517 = vpop.f32.mrf.mxu0
    %1518 = vdwg.mxu0
    %1519 = vst [vmem:[#allocation8] sm:$0xff] %v1513
    %1520 = vst [vmem:[#allocation8 + $0x8] sm:$0xff] %v1516
    // Predicated region
    $region38: #{tpu_custom_call.1} parent=1 // pred_check
      _
    $region39: #{tpu_custom_call.1} parent=1 // pred_check_branch
      %1522 = sbr.rel (0) target = $region41
    $region40: #{tpu_custom_call.1} parent=1 // pred_region
      %s1524 = ssub.s32 256, 256
      %1525 = vsyncadd [#allocation5], %s1524
      %s1526 = sshll.u32 [#allocation8], 4
      %s1527 = int_to_ptr.vmem [resolvable:$true] %s1526
      %1532 = dma.vmem_to_hbm [thread:$0]  %s1527, 256, %s7, [#allocation5], 128, 128, 8
    $region41: #{tpu_custom_call.1} parent=1 // pred_fallthru
      _
    // Predicated region
    $region42: #{tpu_custom_call.1} parent=1 // pred_check
      _
    $region43: #{tpu_custom_call.1} parent=1 // pred_check_branch
      %1534 = sbr.rel (0) target = $region45
    $region44: #{tpu_custom_call.1} parent=1 // pred_region
      %1535 = dma.done [#allocation5], 256
    $region45: #{tpu_custom_call.1} parent=1 // pred_fallthru
      _
    %1536 = vsyncpa [#allocation4], 1
    %1537 = vsyncpa [#allocation7], 1
    %1538 = vsyncpa [#allocation5], 1

</llo_original>
